<compile_context>
chip_gen: v5e
topology: v5e:2x2
jax: 0.10.0
libtpu: 0.0.40
codegen_flags: <defaults>
</compile_context>

<pallas_src>
import functools

import jax
import jax.numpy as jnp
from jax import lax
from jax.experimental import pallas as pl
from jax.experimental.pallas import tpu as pltpu


def _round_up(x, m):
    return (x + m - 1) // m * m


def _bpr_kernel(u_ref, i_ref, j_ref,        # scalar-prefetch (SMEM) int32 [B_pad]
                w_hbm, h_hbm,               # HBM refs: [U, D], [I, D]
                out_ref,                    # VMEM block [1, 8, 128] f32
                wu_buf, hi_buf, hj_buf,     # VMEM gather buffers [TB, D]
                sems,                       # DMA semaphores [3]
                *, tb, dim, batch, unroll):
    t = pl.program_id(0)
    base = t * tb

    # ---- fused gather: one row-DMA per (table, row), all issued up front ----
    def issue(r, carry):
        u_idx = u_ref[base + r]
        i_idx = i_ref[base + r]
        j_idx = j_ref[base + r]
        pltpu.make_async_copy(w_hbm.at[pl.ds(u_idx, 1)],
                              wu_buf.at[pl.ds(r, 1)], sems.at[0]).start()
        pltpu.make_async_copy(h_hbm.at[pl.ds(i_idx, 1)],
                              hi_buf.at[pl.ds(r, 1)], sems.at[1]).start()
        pltpu.make_async_copy(h_hbm.at[pl.ds(j_idx, 1)],
                              hj_buf.at[pl.ds(r, 1)], sems.at[2]).start()
        return carry

    lax.fori_loop(0, tb, issue, 0, unroll=unroll)

    # Drain completions: one wait per issued row-DMA (same transfer size, so
    # the wait descriptor's source row is irrelevant).
    def wait(r, carry):
        pltpu.make_async_copy(w_hbm.at[pl.ds(0, 1)],
                              wu_buf.at[pl.ds(r, 1)], sems.at[0]).wait()
        pltpu.make_async_copy(h_hbm.at[pl.ds(0, 1)],
                              hi_buf.at[pl.ds(r, 1)], sems.at[1]).wait()
        pltpu.make_async_copy(h_hbm.at[pl.ds(0, 1)],
                              hj_buf.at[pl.ds(r, 1)], sems.at[2]).wait()
        return carry

    lax.fori_loop(0, tb, wait, 0, unroll=unroll)

    # ---- compute -------------------------------------------------------------
    wu = wu_buf[...].astype(jnp.float32)
    hi = hi_buf[...].astype(jnp.float32)
    hj = hj_buf[...].astype(jnp.float32)

    # x_uij = sum(W[u]*H[i]) - sum(W[u]*H[j]) = sum(W[u]*(H[i]-H[j]))
    prod = wu * (hi - hj)                                    # [TB, D]

    # Row-sum on the MXU (lane-dense) instead of a cross-lane XLU reduce.
    ones = jnp.ones((dim, 128), jnp.float32)
    x = jnp.dot(prod, ones, preferred_element_type=jnp.float32)[:, 0:1]  # [TB,1]

    # Stable log(sigmoid(x)) = min(x, 0) - log(1 + exp(-|x|)).
    log_sig = jnp.minimum(x, 0.0) - jnp.log(1.0 + jnp.exp(-jnp.abs(x)))

    # Zero out batch-padding rows (they gathered valid row 0, but must not
    # contribute to the mean).
    row = base + lax.broadcasted_iota(jnp.int32, (tb, 1), 0)
    log_sig = jnp.where(row < batch, log_sig, 0.0)

    partial = jnp.sum(log_sig)
    out_ref[...] = jnp.broadcast_to(partial, (1, 8, 128)).astype(jnp.float32)


def bpr_loss(W, H, u, i, j, *, block_rows=256):
    """Pallas-backed BPR forward.  W: [U, D], H: [I, D], u/i/j: [B] ints."""
    _, D = W.shape
    B = u.shape[0]

    # Batch tile size (multiple of 8 sublanes); pad B up to a whole number
    # of tiles.  Padded rows gather row 0 (always valid) and are masked out.
    tb = min(_round_up(block_rows, 8), _round_up(B, 8))
    b_pad = _round_up(B, tb)
    num_tiles = b_pad // tb
    pad = b_pad - B

    u_p = jnp.pad(u.astype(jnp.int32), (0, pad))
    i_p = jnp.pad(i.astype(jnp.int32), (0, pad))
    j_p = jnp.pad(j.astype(jnp.int32), (0, pad))

    # Light unroll of the DMA issue/wait scalar loops.
    unroll = tb if tb <= 8 else 8

    kernel = functools.partial(_bpr_kernel, tb=tb, dim=D, batch=B,
                               unroll=unroll)

    grid_spec = pltpu.PrefetchScalarGridSpec(
        num_scalar_prefetch=3,
        grid=(num_tiles,),
        in_specs=[
            pl.BlockSpec(memory_space=pl.ANY),   # W stays in HBM; rows DMA'd
            pl.BlockSpec(memory_space=pl.ANY),   # H stays in HBM; rows DMA'd
        ],
        out_specs=pl.BlockSpec((1, 8, 128), lambda t, u_r, i_r, j_r: (t, 0, 0)),
        scratch_shapes=[
            pltpu.VMEM((tb, D), W.dtype),
            pltpu.VMEM((tb, D), H.dtype),
            pltpu.VMEM((tb, D), H.dtype),
            pltpu.SemaphoreType.DMA((3,)),
        ],
    )

    partials = pl.pallas_call(
        kernel,
        out_shape=jax.ShapeDtypeStruct((num_tiles, 8, 128), jnp.float32),
        grid_spec=grid_spec,
        compiler_params=pltpu.CompilerParams(
            dimension_semantics=("parallel",)),
    )(u_p, i_p, j_p, W, H)

    # Tiny final reduction (one f32 per tile) in plain JAX.
    return -(jnp.sum(partials[:, 0, 0]) / B)


def bpr_loss_ref(W, H, u, i, j):
    """Pure-JAX reference matching the PyTorch module."""
    x_ui = jnp.sum(W[u, :] * H[i, :], axis=1)
    x_uj = jnp.sum(W[u, :] * H[j, :], axis=1)
    x_uij = x_ui - x_uj
    return -jnp.mean(jnp.log(jax.nn.sigmoid(x_uij)))


if __name__ == "__main__":
    user_size, item_size, dim = 16, 32, 32

    key = jax.random.PRNGKey(0)
    k_w, k_h, k_u, k_i, k_j = jax.random.split(key, 5)

    # torch.rand -> uniform [0, 1)
    W = jax.random.uniform(k_w, (user_size, dim), dtype=jnp.float32)
    H = jax.random.uniform(k_h, (item_size, dim), dtype=jnp.float32)

    # Case 1: batch fits in a single tile.
    batch = 8
    u = jax.random.randint(k_u, (batch,), 0, user_size, dtype=jnp.int32)
    i = jax.random.randint(k_i, (batch,), 0, item_size, dtype=jnp.int32)
    j = jax.random.randint(k_j, (batch,), 0, item_size, dtype=jnp.int32)
    loss = jax.block_until_ready(bpr_loss(W, H, u, i, j))
    ref = jax.block_until_ready(bpr_loss_ref(W, H, u, i, j))
    assert jnp.allclose(loss, ref, rtol=1e-5, atol=1e-5), (loss, ref)

    # Case 2: multiple grid tiles + batch padding/masking.
    batch = 20
    u = jax.random.randint(k_u, (batch,), 0, user_size, dtype=jnp.int32)
    i = jax.random.randint(k_i, (batch,), 0, item_size, dtype=jnp.int32)
    j = jax.random.randint(k_j, (batch,), 0, item_size, dtype=jnp.int32)
    loss = jax.block_until_ready(bpr_loss(W, H, u, i, j, block_rows=8))
    ref = jax.block_until_ready(bpr_loss_ref(W, H, u, i, j))
    assert jnp.allclose(loss, ref, rtol=1e-5, atol=1e-5), (loss, ref)

    print("KERNEL_OK")
</pallas_src>

<mosaic_0001>
module attributes {stable_mosaic.version = 11 : i64} {
  func.func @_bpr_kernel(%arg0: i32, %arg1: memref<8xi32, #tpu.memory_space<smem>>, %arg2: memref<8xi32, #tpu.memory_space<smem>>, %arg3: memref<8xi32, #tpu.memory_space<smem>>, %arg4: memref<16x32xf32, #tpu.memory_space<any>>, %arg5: memref<32x32xf32, #tpu.memory_space<any>>, %arg6: memref<1x8x128xf32, #tpu.memory_space<vmem>>, %arg7: memref<8x32xf32, #tpu.memory_space<vmem>>, %arg8: memref<8x32xf32, #tpu.memory_space<vmem>>, %arg9: memref<8x32xf32, #tpu.memory_space<vmem>>, %arg10: memref<3x!tpu.dma_semaphore, #tpu.memory_space<semaphore_mem>>) attributes {dimension_semantics = [#tpu.dimension_semantics<parallel>], iteration_bounds = array<i64: 1>, scalar_prefetch = 3 : i64, scratch_operands = 4 : i64, tpu.core_type = #tpu.core_type<tc>, window_params = [{}, {}, {transform_indices = @transform_2, window_bounds = array<i64: 1, 8, 128>}]} {
    %c8_i32 = arith.constant 8 : i32
    %0 = arith.muli %arg0, %c8_i32 : i32
    %c0_i32 = arith.constant 0 : i32
    %1 = arith.addi %0, %c0_i32 : i32
    %2 = arith.index_cast %1 : i32 to index
    %3 = memref.load %arg1[%2] : memref<8xi32, #tpu.memory_space<smem>>
    %4 = arith.addi %0, %c0_i32 : i32
    %5 = arith.index_cast %4 : i32 to index
    %6 = memref.load %arg2[%5] : memref<8xi32, #tpu.memory_space<smem>>
    %7 = arith.addi %0, %c0_i32 : i32
    %8 = arith.index_cast %7 : i32 to index
    %9 = memref.load %arg3[%8] : memref<8xi32, #tpu.memory_space<smem>>
    %c0_i32_0 = arith.constant 0 : i32
    %c0_i32_1 = arith.constant 0 : i32
    %10 = tpu.memref_slice %arg4[%3, %c0_i32_1] : memref<16x32xf32, #tpu.memory_space<any>> -> memref<1x32xf32, #tpu.memory_space<any>>
    %c0_i32_2 = arith.constant 0 : i32
    %11 = tpu.memref_slice %arg7[%c0_i32, %c0_i32_2] : memref<8x32xf32, #tpu.memory_space<vmem>> -> memref<1x32xf32, #tpu.memory_space<vmem>>
    %12 = tpu.memref_slice %arg10[%c0_i32_0] : memref<3x!tpu.dma_semaphore, #tpu.memory_space<semaphore_mem>> -> memref<1x!tpu.dma_semaphore, #tpu.memory_space<semaphore_mem>>
    %13 = tpu.memref_squeeze %12 : memref<1x!tpu.dma_semaphore, #tpu.memory_space<semaphore_mem>> -> memref<!tpu.dma_semaphore, #tpu.memory_space<semaphore_mem>>
    tpu.enqueue_dma source(%10 : memref<1x32xf32, #tpu.memory_space<any>>) target(%11 : memref<1x32xf32, #tpu.memory_space<vmem>>) target_semaphore(%13 : memref<!tpu.dma_semaphore, #tpu.memory_space<semaphore_mem>>)
    %c1_i32 = arith.constant 1 : i32
    %c0_i32_3 = arith.constant 0 : i32
    %14 = tpu.memref_slice %arg5[%6, %c0_i32_3] : memref<32x32xf32, #tpu.memory_space<any>> -> memref<1x32xf32, #tpu.memory_space<any>>
    %c0_i32_4 = arith.constant 0 : i32
    %15 = tpu.memref_slice %arg8[%c0_i32, %c0_i32_4] : memref<8x32xf32, #tpu.memory_space<vmem>> -> memref<1x32xf32, #tpu.memory_space<vmem>>
    %16 = tpu.memref_slice %arg10[%c1_i32] : memref<3x!tpu.dma_semaphore, #tpu.memory_space<semaphore_mem>> -> memref<1x!tpu.dma_semaphore, #tpu.memory_space<semaphore_mem>>
    %17 = tpu.memref_squeeze %16 : memref<1x!tpu.dma_semaphore, #tpu.memory_space<semaphore_mem>> -> memref<!tpu.dma_semaphore, #tpu.memory_space<semaphore_mem>>
    tpu.enqueue_dma source(%14 : memref<1x32xf32, #tpu.memory_space<any>>) target(%15 : memref<1x32xf32, #tpu.memory_space<vmem>>) target_semaphore(%17 : memref<!tpu.dma_semaphore, #tpu.memory_space<semaphore_mem>>)
    %c2_i32 = arith.constant 2 : i32
    %c0_i32_5 = arith.constant 0 : i32
    %18 = tpu.memref_slice %arg5[%9, %c0_i32_5] : memref<32x32xf32, #tpu.memory_space<any>> -> memref<1x32xf32, #tpu.memory_space<any>>
    %c0_i32_6 = arith.constant 0 : i32
    %19 = tpu.memref_slice %arg9[%c0_i32, %c0_i32_6] : memref<8x32xf32, #tpu.memory_space<vmem>> -> memref<1x32xf32, #tpu.memory_space<vmem>>
    %20 = tpu.memref_slice %arg10[%c2_i32] : memref<3x!tpu.dma_semaphore, #tpu.memory_space<semaphore_mem>> -> memref<1x!tpu.dma_semaphore, #tpu.memory_space<semaphore_mem>>
    %21 = tpu.memref_squeeze %20 : memref<1x!tpu.dma_semaphore, #tpu.memory_space<semaphore_mem>> -> memref<!tpu.dma_semaphore, #tpu.memory_space<semaphore_mem>>
    tpu.enqueue_dma source(%18 : memref<1x32xf32, #tpu.memory_space<any>>) target(%19 : memref<1x32xf32, #tpu.memory_space<vmem>>) target_semaphore(%21 : memref<!tpu.dma_semaphore, #tpu.memory_space<semaphore_mem>>)
    %c1_i32_7 = arith.constant 1 : i32
    %22 = arith.addi %0, %c1_i32_7 : i32
    %23 = arith.index_cast %22 : i32 to index
    %24 = memref.load %arg1[%23] : memref<8xi32, #tpu.memory_space<smem>>
    %25 = arith.addi %0, %c1_i32_7 : i32
    %26 = arith.index_cast %25 : i32 to index
    %27 = memref.load %arg2[%26] : memref<8xi32, #tpu.memory_space<smem>>
    %28 = arith.addi %0, %c1_i32_7 : i32
    %29 = arith.index_cast %28 : i32 to index
    %30 = memref.load %arg3[%29] : memref<8xi32, #tpu.memory_space<smem>>
    %c0_i32_8 = arith.constant 0 : i32
    %c0_i32_9 = arith.constant 0 : i32
    %31 = tpu.memref_slice %arg4[%24, %c0_i32_9] : memref<16x32xf32, #tpu.memory_space<any>> -> memref<1x32xf32, #tpu.memory_space<any>>
    %c0_i32_10 = arith.constant 0 : i32
    %32 = tpu.memref_slice %arg7[%c1_i32_7, %c0_i32_10] : memref<8x32xf32, #tpu.memory_space<vmem>> -> memref<1x32xf32, #tpu.memory_space<vmem>>
    %33 = tpu.memref_slice %arg10[%c0_i32_8] : memref<3x!tpu.dma_semaphore, #tpu.memory_space<semaphore_mem>> -> memref<1x!tpu.dma_semaphore, #tpu.memory_space<semaphore_mem>>
    %34 = tpu.memref_squeeze %33 : memref<1x!tpu.dma_semaphore, #tpu.memory_space<semaphore_mem>> -> memref<!tpu.dma_semaphore, #tpu.memory_space<semaphore_mem>>
    tpu.enqueue_dma source(%31 : memref<1x32xf32, #tpu.memory_space<any>>) target(%32 : memref<1x32xf32, #tpu.memory_space<vmem>>) target_semaphore(%34 : memref<!tpu.dma_semaphore, #tpu.memory_space<semaphore_mem>>)
    %c1_i32_11 = arith.constant 1 : i32
    %c0_i32_12 = arith.constant 0 : i32
    %35 = tpu.memref_slice %arg5[%27, %c0_i32_12] : memref<32x32xf32, #tpu.memory_space<any>> -> memref<1x32xf32, #tpu.memory_space<any>>
    %c0_i32_13 = arith.constant 0 : i32
    %36 = tpu.memref_slice %arg8[%c1_i32_7, %c0_i32_13] : memref<8x32xf32, #tpu.memory_space<vmem>> -> memref<1x32xf32, #tpu.memory_space<vmem>>
    %37 = tpu.memref_slice %arg10[%c1_i32_11] : memref<3x!tpu.dma_semaphore, #tpu.memory_space<semaphore_mem>> -> memref<1x!tpu.dma_semaphore, #tpu.memory_space<semaphore_mem>>
    %38 = tpu.memref_squeeze %37 : memref<1x!tpu.dma_semaphore, #tpu.memory_space<semaphore_mem>> -> memref<!tpu.dma_semaphore, #tpu.memory_space<semaphore_mem>>
    tpu.enqueue_dma source(%35 : memref<1x32xf32, #tpu.memory_space<any>>) target(%36 : memref<1x32xf32, #tpu.memory_space<vmem>>) target_semaphore(%38 : memref<!tpu.dma_semaphore, #tpu.memory_space<semaphore_mem>>)
    %c2_i32_14 = arith.constant 2 : i32
    %c0_i32_15 = arith.constant 0 : i32
    %39 = tpu.memref_slice %arg5[%30, %c0_i32_15] : memref<32x32xf32, #tpu.memory_space<any>> -> memref<1x32xf32, #tpu.memory_space<any>>
    %c0_i32_16 = arith.constant 0 : i32
    %40 = tpu.memref_slice %arg9[%c1_i32_7, %c0_i32_16] : memref<8x32xf32, #tpu.memory_space<vmem>> -> memref<1x32xf32, #tpu.memory_space<vmem>>
    %41 = tpu.memref_slice %arg10[%c2_i32_14] : memref<3x!tpu.dma_semaphore, #tpu.memory_space<semaphore_mem>> -> memref<1x!tpu.dma_semaphore, #tpu.memory_space<semaphore_mem>>
    %42 = tpu.memref_squeeze %41 : memref<1x!tpu.dma_semaphore, #tpu.memory_space<semaphore_mem>> -> memref<!tpu.dma_semaphore, #tpu.memory_space<semaphore_mem>>
    tpu.enqueue_dma source(%39 : memref<1x32xf32, #tpu.memory_space<any>>) target(%40 : memref<1x32xf32, #tpu.memory_space<vmem>>) target_semaphore(%42 : memref<!tpu.dma_semaphore, #tpu.memory_space<semaphore_mem>>)
    %c2_i32_17 = arith.constant 2 : i32
    %43 = arith.addi %0, %c2_i32_17 : i32
    %44 = arith.index_cast %43 : i32 to index
    %45 = memref.load %arg1[%44] : memref<8xi32, #tpu.memory_space<smem>>
    %46 = arith.addi %0, %c2_i32_17 : i32
    %47 = arith.index_cast %46 : i32 to index
    %48 = memref.load %arg2[%47] : memref<8xi32, #tpu.memory_space<smem>>
    %49 = arith.addi %0, %c2_i32_17 : i32
    %50 = arith.index_cast %49 : i32 to index
    %51 = memref.load %arg3[%50] : memref<8xi32, #tpu.memory_space<smem>>
    %c0_i32_18 = arith.constant 0 : i32
    %c0_i32_19 = arith.constant 0 : i32
    %52 = tpu.memref_slice %arg4[%45, %c0_i32_19] : memref<16x32xf32, #tpu.memory_space<any>> -> memref<1x32xf32, #tpu.memory_space<any>>
    %c0_i32_20 = arith.constant 0 : i32
    %53 = tpu.memref_slice %arg7[%c2_i32_17, %c0_i32_20] : memref<8x32xf32, #tpu.memory_space<vmem>> -> memref<1x32xf32, #tpu.memory_space<vmem>>
    %54 = tpu.memref_slice %arg10[%c0_i32_18] : memref<3x!tpu.dma_semaphore, #tpu.memory_space<semaphore_mem>> -> memref<1x!tpu.dma_semaphore, #tpu.memory_space<semaphore_mem>>
    %55 = tpu.memref_squeeze %54 : memref<1x!tpu.dma_semaphore, #tpu.memory_space<semaphore_mem>> -> memref<!tpu.dma_semaphore, #tpu.memory_space<semaphore_mem>>
    tpu.enqueue_dma source(%52 : memref<1x32xf32, #tpu.memory_space<any>>) target(%53 : memref<1x32xf32, #tpu.memory_space<vmem>>) target_semaphore(%55 : memref<!tpu.dma_semaphore, #tpu.memory_space<semaphore_mem>>)
    %c1_i32_21 = arith.constant 1 : i32
    %c0_i32_22 = arith.constant 0 : i32
    %56 = tpu.memref_slice %arg5[%48, %c0_i32_22] : memref<32x32xf32, #tpu.memory_space<any>> -> memref<1x32xf32, #tpu.memory_space<any>>
    %c0_i32_23 = arith.constant 0 : i32
    %57 = tpu.memref_slice %arg8[%c2_i32_17, %c0_i32_23] : memref<8x32xf32, #tpu.memory_space<vmem>> -> memref<1x32xf32, #tpu.memory_space<vmem>>
    %58 = tpu.memref_slice %arg10[%c1_i32_21] : memref<3x!tpu.dma_semaphore, #tpu.memory_space<semaphore_mem>> -> memref<1x!tpu.dma_semaphore, #tpu.memory_space<semaphore_mem>>
    %59 = tpu.memref_squeeze %58 : memref<1x!tpu.dma_semaphore, #tpu.memory_space<semaphore_mem>> -> memref<!tpu.dma_semaphore, #tpu.memory_space<semaphore_mem>>
    tpu.enqueue_dma source(%56 : memref<1x32xf32, #tpu.memory_space<any>>) target(%57 : memref<1x32xf32, #tpu.memory_space<vmem>>) target_semaphore(%59 : memref<!tpu.dma_semaphore, #tpu.memory_space<semaphore_mem>>)
    %c2_i32_24 = arith.constant 2 : i32
    %c0_i32_25 = arith.constant 0 : i32
    %60 = tpu.memref_slice %arg5[%51, %c0_i32_25] : memref<32x32xf32, #tpu.memory_space<any>> -> memref<1x32xf32, #tpu.memory_space<any>>
    %c0_i32_26 = arith.constant 0 : i32
    %61 = tpu.memref_slice %arg9[%c2_i32_17, %c0_i32_26] : memref<8x32xf32, #tpu.memory_space<vmem>> -> memref<1x32xf32, #tpu.memory_space<vmem>>
    %62 = tpu.memref_slice %arg10[%c2_i32_24] : memref<3x!tpu.dma_semaphore, #tpu.memory_space<semaphore_mem>> -> memref<1x!tpu.dma_semaphore, #tpu.memory_space<semaphore_mem>>
    %63 = tpu.memref_squeeze %62 : memref<1x!tpu.dma_semaphore, #tpu.memory_space<semaphore_mem>> -> memref<!tpu.dma_semaphore, #tpu.memory_space<semaphore_mem>>
    tpu.enqueue_dma source(%60 : memref<1x32xf32, #tpu.memory_space<any>>) target(%61 : memref<1x32xf32, #tpu.memory_space<vmem>>) target_semaphore(%63 : memref<!tpu.dma_semaphore, #tpu.memory_space<semaphore_mem>>)
    %c3_i32 = arith.constant 3 : i32
    %64 = arith.addi %0, %c3_i32 : i32
    %65 = arith.index_cast %64 : i32 to index
    %66 = memref.load %arg1[%65] : memref<8xi32, #tpu.memory_space<smem>>
    %67 = arith.addi %0, %c3_i32 : i32
    %68 = arith.index_cast %67 : i32 to index
    %69 = memref.load %arg2[%68] : memref<8xi32, #tpu.memory_space<smem>>
    %70 = arith.addi %0, %c3_i32 : i32
    %71 = arith.index_cast %70 : i32 to index
    %72 = memref.load %arg3[%71] : memref<8xi32, #tpu.memory_space<smem>>
    %c0_i32_27 = arith.constant 0 : i32
    %c0_i32_28 = arith.constant 0 : i32
    %73 = tpu.memref_slice %arg4[%66, %c0_i32_28] : memref<16x32xf32, #tpu.memory_space<any>> -> memref<1x32xf32, #tpu.memory_space<any>>
    %c0_i32_29 = arith.constant 0 : i32
    %74 = tpu.memref_slice %arg7[%c3_i32, %c0_i32_29] : memref<8x32xf32, #tpu.memory_space<vmem>> -> memref<1x32xf32, #tpu.memory_space<vmem>>
    %75 = tpu.memref_slice %arg10[%c0_i32_27] : memref<3x!tpu.dma_semaphore, #tpu.memory_space<semaphore_mem>> -> memref<1x!tpu.dma_semaphore, #tpu.memory_space<semaphore_mem>>
    %76 = tpu.memref_squeeze %75 : memref<1x!tpu.dma_semaphore, #tpu.memory_space<semaphore_mem>> -> memref<!tpu.dma_semaphore, #tpu.memory_space<semaphore_mem>>
    tpu.enqueue_dma source(%73 : memref<1x32xf32, #tpu.memory_space<any>>) target(%74 : memref<1x32xf32, #tpu.memory_space<vmem>>) target_semaphore(%76 : memref<!tpu.dma_semaphore, #tpu.memory_space<semaphore_mem>>)
    %c1_i32_30 = arith.constant 1 : i32
    %c0_i32_31 = arith.constant 0 : i32
    %77 = tpu.memref_slice %arg5[%69, %c0_i32_31] : memref<32x32xf32, #tpu.memory_space<any>> -> memref<1x32xf32, #tpu.memory_space<any>>
    %c0_i32_32 = arith.constant 0 : i32
    %78 = tpu.memref_slice %arg8[%c3_i32, %c0_i32_32] : memref<8x32xf32, #tpu.memory_space<vmem>> -> memref<1x32xf32, #tpu.memory_space<vmem>>
    %79 = tpu.memref_slice %arg10[%c1_i32_30] : memref<3x!tpu.dma_semaphore, #tpu.memory_space<semaphore_mem>> -> memref<1x!tpu.dma_semaphore, #tpu.memory_space<semaphore_mem>>
    %80 = tpu.memref_squeeze %79 : memref<1x!tpu.dma_semaphore, #tpu.memory_space<semaphore_mem>> -> memref<!tpu.dma_semaphore, #tpu.memory_space<semaphore_mem>>
    tpu.enqueue_dma source(%77 : memref<1x32xf32, #tpu.memory_space<any>>) target(%78 : memref<1x32xf32, #tpu.memory_space<vmem>>) target_semaphore(%80 : memref<!tpu.dma_semaphore, #tpu.memory_space<semaphore_mem>>)
    %c2_i32_33 = arith.constant 2 : i32
    %c0_i32_34 = arith.constant 0 : i32
    %81 = tpu.memref_slice %arg5[%72, %c0_i32_34] : memref<32x32xf32, #tpu.memory_space<any>> -> memref<1x32xf32, #tpu.memory_space<any>>
    %c0_i32_35 = arith.constant 0 : i32
    %82 = tpu.memref_slice %arg9[%c3_i32, %c0_i32_35] : memref<8x32xf32, #tpu.memory_space<vmem>> -> memref<1x32xf32, #tpu.memory_space<vmem>>
    %83 = tpu.memref_slice %arg10[%c2_i32_33] : memref<3x!tpu.dma_semaphore, #tpu.memory_space<semaphore_mem>> -> memref<1x!tpu.dma_semaphore, #tpu.memory_space<semaphore_mem>>
    %84 = tpu.memref_squeeze %83 : memref<1x!tpu.dma_semaphore, #tpu.memory_space<semaphore_mem>> -> memref<!tpu.dma_semaphore, #tpu.memory_space<semaphore_mem>>
    tpu.enqueue_dma source(%81 : memref<1x32xf32, #tpu.memory_space<any>>) target(%82 : memref<1x32xf32, #tpu.memory_space<vmem>>) target_semaphore(%84 : memref<!tpu.dma_semaphore, #tpu.memory_space<semaphore_mem>>)
    %c4_i32 = arith.constant 4 : i32
    %85 = arith.addi %0, %c4_i32 : i32
    %86 = arith.index_cast %85 : i32 to index
    %87 = memref.load %arg1[%86] : memref<8xi32, #tpu.memory_space<smem>>
    %88 = arith.addi %0, %c4_i32 : i32
    %89 = arith.index_cast %88 : i32 to index
    %90 = memref.load %arg2[%89] : memref<8xi32, #tpu.memory_space<smem>>
    %91 = arith.addi %0, %c4_i32 : i32
    %92 = arith.index_cast %91 : i32 to index
    %93 = memref.load %arg3[%92] : memref<8xi32, #tpu.memory_space<smem>>
    %c0_i32_36 = arith.constant 0 : i32
    %c0_i32_37 = arith.constant 0 : i32
    %94 = tpu.memref_slice %arg4[%87, %c0_i32_37] : memref<16x32xf32, #tpu.memory_space<any>> -> memref<1x32xf32, #tpu.memory_space<any>>
    %c0_i32_38 = arith.constant 0 : i32
    %95 = tpu.memref_slice %arg7[%c4_i32, %c0_i32_38] : memref<8x32xf32, #tpu.memory_space<vmem>> -> memref<1x32xf32, #tpu.memory_space<vmem>>
    %96 = tpu.memref_slice %arg10[%c0_i32_36] : memref<3x!tpu.dma_semaphore, #tpu.memory_space<semaphore_mem>> -> memref<1x!tpu.dma_semaphore, #tpu.memory_space<semaphore_mem>>
    %97 = tpu.memref_squeeze %96 : memref<1x!tpu.dma_semaphore, #tpu.memory_space<semaphore_mem>> -> memref<!tpu.dma_semaphore, #tpu.memory_space<semaphore_mem>>
    tpu.enqueue_dma source(%94 : memref<1x32xf32, #tpu.memory_space<any>>) target(%95 : memref<1x32xf32, #tpu.memory_space<vmem>>) target_semaphore(%97 : memref<!tpu.dma_semaphore, #tpu.memory_space<semaphore_mem>>)
    %c1_i32_39 = arith.constant 1 : i32
    %c0_i32_40 = arith.constant 0 : i32
    %98 = tpu.memref_slice %arg5[%90, %c0_i32_40] : memref<32x32xf32, #tpu.memory_space<any>> -> memref<1x32xf32, #tpu.memory_space<any>>
    %c0_i32_41 = arith.constant 0 : i32
    %99 = tpu.memref_slice %arg8[%c4_i32, %c0_i32_41] : memref<8x32xf32, #tpu.memory_space<vmem>> -> memref<1x32xf32, #tpu.memory_space<vmem>>
    %100 = tpu.memref_slice %arg10[%c1_i32_39] : memref<3x!tpu.dma_semaphore, #tpu.memory_space<semaphore_mem>> -> memref<1x!tpu.dma_semaphore, #tpu.memory_space<semaphore_mem>>
    %101 = tpu.memref_squeeze %100 : memref<1x!tpu.dma_semaphore, #tpu.memory_space<semaphore_mem>> -> memref<!tpu.dma_semaphore, #tpu.memory_space<semaphore_mem>>
    tpu.enqueue_dma source(%98 : memref<1x32xf32, #tpu.memory_space<any>>) target(%99 : memref<1x32xf32, #tpu.memory_space<vmem>>) target_semaphore(%101 : memref<!tpu.dma_semaphore, #tpu.memory_space<semaphore_mem>>)
    %c2_i32_42 = arith.constant 2 : i32
    %c0_i32_43 = arith.constant 0 : i32
    %102 = tpu.memref_slice %arg5[%93, %c0_i32_43] : memref<32x32xf32, #tpu.memory_space<any>> -> memref<1x32xf32, #tpu.memory_space<any>>
    %c0_i32_44 = arith.constant 0 : i32
    %103 = tpu.memref_slice %arg9[%c4_i32, %c0_i32_44] : memref<8x32xf32, #tpu.memory_space<vmem>> -> memref<1x32xf32, #tpu.memory_space<vmem>>
    %104 = tpu.memref_slice %arg10[%c2_i32_42] : memref<3x!tpu.dma_semaphore, #tpu.memory_space<semaphore_mem>> -> memref<1x!tpu.dma_semaphore, #tpu.memory_space<semaphore_mem>>
    %105 = tpu.memref_squeeze %104 : memref<1x!tpu.dma_semaphore, #tpu.memory_space<semaphore_mem>> -> memref<!tpu.dma_semaphore, #tpu.memory_space<semaphore_mem>>
    tpu.enqueue_dma source(%102 : memref<1x32xf32, #tpu.memory_space<any>>) target(%103 : memref<1x32xf32, #tpu.memory_space<vmem>>) target_semaphore(%105 : memref<!tpu.dma_semaphore, #tpu.memory_space<semaphore_mem>>)
    %c5_i32 = arith.constant 5 : i32
    %106 = arith.addi %0, %c5_i32 : i32
    %107 = arith.index_cast %106 : i32 to index
    %108 = memref.load %arg1[%107] : memref<8xi32, #tpu.memory_space<smem>>
    %109 = arith.addi %0, %c5_i32 : i32
    %110 = arith.index_cast %109 : i32 to index
    %111 = memref.load %arg2[%110] : memref<8xi32, #tpu.memory_space<smem>>
    %112 = arith.addi %0, %c5_i32 : i32
    %113 = arith.index_cast %112 : i32 to index
    %114 = memref.load %arg3[%113] : memref<8xi32, #tpu.memory_space<smem>>
    %c0_i32_45 = arith.constant 0 : i32
    %c0_i32_46 = arith.constant 0 : i32
    %115 = tpu.memref_slice %arg4[%108, %c0_i32_46] : memref<16x32xf32, #tpu.memory_space<any>> -> memref<1x32xf32, #tpu.memory_space<any>>
    %c0_i32_47 = arith.constant 0 : i32
    %116 = tpu.memref_slice %arg7[%c5_i32, %c0_i32_47] : memref<8x32xf32, #tpu.memory_space<vmem>> -> memref<1x32xf32, #tpu.memory_space<vmem>>
    %117 = tpu.memref_slice %arg10[%c0_i32_45] : memref<3x!tpu.dma_semaphore, #tpu.memory_space<semaphore_mem>> -> memref<1x!tpu.dma_semaphore, #tpu.memory_space<semaphore_mem>>
    %118 = tpu.memref_squeeze %117 : memref<1x!tpu.dma_semaphore, #tpu.memory_space<semaphore_mem>> -> memref<!tpu.dma_semaphore, #tpu.memory_space<semaphore_mem>>
    tpu.enqueue_dma source(%115 : memref<1x32xf32, #tpu.memory_space<any>>) target(%116 : memref<1x32xf32, #tpu.memory_space<vmem>>) target_semaphore(%118 : memref<!tpu.dma_semaphore, #tpu.memory_space<semaphore_mem>>)
    %c1_i32_48 = arith.constant 1 : i32
    %c0_i32_49 = arith.constant 0 : i32
    %119 = tpu.memref_slice %arg5[%111, %c0_i32_49] : memref<32x32xf32, #tpu.memory_space<any>> -> memref<1x32xf32, #tpu.memory_space<any>>
    %c0_i32_50 = arith.constant 0 : i32
    %120 = tpu.memref_slice %arg8[%c5_i32, %c0_i32_50] : memref<8x32xf32, #tpu.memory_space<vmem>> -> memref<1x32xf32, #tpu.memory_space<vmem>>
    %121 = tpu.memref_slice %arg10[%c1_i32_48] : memref<3x!tpu.dma_semaphore, #tpu.memory_space<semaphore_mem>> -> memref<1x!tpu.dma_semaphore, #tpu.memory_space<semaphore_mem>>
    %122 = tpu.memref_squeeze %121 : memref<1x!tpu.dma_semaphore, #tpu.memory_space<semaphore_mem>> -> memref<!tpu.dma_semaphore, #tpu.memory_space<semaphore_mem>>
    tpu.enqueue_dma source(%119 : memref<1x32xf32, #tpu.memory_space<any>>) target(%120 : memref<1x32xf32, #tpu.memory_space<vmem>>) target_semaphore(%122 : memref<!tpu.dma_semaphore, #tpu.memory_space<semaphore_mem>>)
    %c2_i32_51 = arith.constant 2 : i32
    %c0_i32_52 = arith.constant 0 : i32
    %123 = tpu.memref_slice %arg5[%114, %c0_i32_52] : memref<32x32xf32, #tpu.memory_space<any>> -> memref<1x32xf32, #tpu.memory_space<any>>
    %c0_i32_53 = arith.constant 0 : i32
    %124 = tpu.memref_slice %arg9[%c5_i32, %c0_i32_53] : memref<8x32xf32, #tpu.memory_space<vmem>> -> memref<1x32xf32, #tpu.memory_space<vmem>>
    %125 = tpu.memref_slice %arg10[%c2_i32_51] : memref<3x!tpu.dma_semaphore, #tpu.memory_space<semaphore_mem>> -> memref<1x!tpu.dma_semaphore, #tpu.memory_space<semaphore_mem>>
    %126 = tpu.memref_squeeze %125 : memref<1x!tpu.dma_semaphore, #tpu.memory_space<semaphore_mem>> -> memref<!tpu.dma_semaphore, #tpu.memory_space<semaphore_mem>>
    tpu.enqueue_dma source(%123 : memref<1x32xf32, #tpu.memory_space<any>>) target(%124 : memref<1x32xf32, #tpu.memory_space<vmem>>) target_semaphore(%126 : memref<!tpu.dma_semaphore, #tpu.memory_space<semaphore_mem>>)
    %c6_i32 = arith.constant 6 : i32
    %127 = arith.addi %0, %c6_i32 : i32
    %128 = arith.index_cast %127 : i32 to index
    %129 = memref.load %arg1[%128] : memref<8xi32, #tpu.memory_space<smem>>
    %130 = arith.addi %0, %c6_i32 : i32
    %131 = arith.index_cast %130 : i32 to index
    %132 = memref.load %arg2[%131] : memref<8xi32, #tpu.memory_space<smem>>
    %133 = arith.addi %0, %c6_i32 : i32
    %134 = arith.index_cast %133 : i32 to index
    %135 = memref.load %arg3[%134] : memref<8xi32, #tpu.memory_space<smem>>
    %c0_i32_54 = arith.constant 0 : i32
    %c0_i32_55 = arith.constant 0 : i32
    %136 = tpu.memref_slice %arg4[%129, %c0_i32_55] : memref<16x32xf32, #tpu.memory_space<any>> -> memref<1x32xf32, #tpu.memory_space<any>>
    %c0_i32_56 = arith.constant 0 : i32
    %137 = tpu.memref_slice %arg7[%c6_i32, %c0_i32_56] : memref<8x32xf32, #tpu.memory_space<vmem>> -> memref<1x32xf32, #tpu.memory_space<vmem>>
    %138 = tpu.memref_slice %arg10[%c0_i32_54] : memref<3x!tpu.dma_semaphore, #tpu.memory_space<semaphore_mem>> -> memref<1x!tpu.dma_semaphore, #tpu.memory_space<semaphore_mem>>
    %139 = tpu.memref_squeeze %138 : memref<1x!tpu.dma_semaphore, #tpu.memory_space<semaphore_mem>> -> memref<!tpu.dma_semaphore, #tpu.memory_space<semaphore_mem>>
    tpu.enqueue_dma source(%136 : memref<1x32xf32, #tpu.memory_space<any>>) target(%137 : memref<1x32xf32, #tpu.memory_space<vmem>>) target_semaphore(%139 : memref<!tpu.dma_semaphore, #tpu.memory_space<semaphore_mem>>)
    %c1_i32_57 = arith.constant 1 : i32
    %c0_i32_58 = arith.constant 0 : i32
    %140 = tpu.memref_slice %arg5[%132, %c0_i32_58] : memref<32x32xf32, #tpu.memory_space<any>> -> memref<1x32xf32, #tpu.memory_space<any>>
    %c0_i32_59 = arith.constant 0 : i32
    %141 = tpu.memref_slice %arg8[%c6_i32, %c0_i32_59] : memref<8x32xf32, #tpu.memory_space<vmem>> -> memref<1x32xf32, #tpu.memory_space<vmem>>
    %142 = tpu.memref_slice %arg10[%c1_i32_57] : memref<3x!tpu.dma_semaphore, #tpu.memory_space<semaphore_mem>> -> memref<1x!tpu.dma_semaphore, #tpu.memory_space<semaphore_mem>>
    %143 = tpu.memref_squeeze %142 : memref<1x!tpu.dma_semaphore, #tpu.memory_space<semaphore_mem>> -> memref<!tpu.dma_semaphore, #tpu.memory_space<semaphore_mem>>
    tpu.enqueue_dma source(%140 : memref<1x32xf32, #tpu.memory_space<any>>) target(%141 : memref<1x32xf32, #tpu.memory_space<vmem>>) target_semaphore(%143 : memref<!tpu.dma_semaphore, #tpu.memory_space<semaphore_mem>>)
    %c2_i32_60 = arith.constant 2 : i32
    %c0_i32_61 = arith.constant 0 : i32
    %144 = tpu.memref_slice %arg5[%135, %c0_i32_61] : memref<32x32xf32, #tpu.memory_space<any>> -> memref<1x32xf32, #tpu.memory_space<any>>
    %c0_i32_62 = arith.constant 0 : i32
    %145 = tpu.memref_slice %arg9[%c6_i32, %c0_i32_62] : memref<8x32xf32, #tpu.memory_space<vmem>> -> memref<1x32xf32, #tpu.memory_space<vmem>>
    %146 = tpu.memref_slice %arg10[%c2_i32_60] : memref<3x!tpu.dma_semaphore, #tpu.memory_space<semaphore_mem>> -> memref<1x!tpu.dma_semaphore, #tpu.memory_space<semaphore_mem>>
    %147 = tpu.memref_squeeze %146 : memref<1x!tpu.dma_semaphore, #tpu.memory_space<semaphore_mem>> -> memref<!tpu.dma_semaphore, #tpu.memory_space<semaphore_mem>>
    tpu.enqueue_dma source(%144 : memref<1x32xf32, #tpu.memory_space<any>>) target(%145 : memref<1x32xf32, #tpu.memory_space<vmem>>) target_semaphore(%147 : memref<!tpu.dma_semaphore, #tpu.memory_space<semaphore_mem>>)
    %c7_i32 = arith.constant 7 : i32
    %148 = arith.addi %0, %c7_i32 : i32
    %149 = arith.index_cast %148 : i32 to index
    %150 = memref.load %arg1[%149] : memref<8xi32, #tpu.memory_space<smem>>
    %151 = arith.addi %0, %c7_i32 : i32
    %152 = arith.index_cast %151 : i32 to index
    %153 = memref.load %arg2[%152] : memref<8xi32, #tpu.memory_space<smem>>
    %154 = arith.addi %0, %c7_i32 : i32
    %155 = arith.index_cast %154 : i32 to index
    %156 = memref.load %arg3[%155] : memref<8xi32, #tpu.memory_space<smem>>
    %c0_i32_63 = arith.constant 0 : i32
    %c0_i32_64 = arith.constant 0 : i32
    %157 = tpu.memref_slice %arg4[%150, %c0_i32_64] : memref<16x32xf32, #tpu.memory_space<any>> -> memref<1x32xf32, #tpu.memory_space<any>>
    %c0_i32_65 = arith.constant 0 : i32
    %158 = tpu.memref_slice %arg7[%c7_i32, %c0_i32_65] : memref<8x32xf32, #tpu.memory_space<vmem>> -> memref<1x32xf32, #tpu.memory_space<vmem>>
    %159 = tpu.memref_slice %arg10[%c0_i32_63] : memref<3x!tpu.dma_semaphore, #tpu.memory_space<semaphore_mem>> -> memref<1x!tpu.dma_semaphore, #tpu.memory_space<semaphore_mem>>
    %160 = tpu.memref_squeeze %159 : memref<1x!tpu.dma_semaphore, #tpu.memory_space<semaphore_mem>> -> memref<!tpu.dma_semaphore, #tpu.memory_space<semaphore_mem>>
    tpu.enqueue_dma source(%157 : memref<1x32xf32, #tpu.memory_space<any>>) target(%158 : memref<1x32xf32, #tpu.memory_space<vmem>>) target_semaphore(%160 : memref<!tpu.dma_semaphore, #tpu.memory_space<semaphore_mem>>)
    %c1_i32_66 = arith.constant 1 : i32
    %c0_i32_67 = arith.constant 0 : i32
    %161 = tpu.memref_slice %arg5[%153, %c0_i32_67] : memref<32x32xf32, #tpu.memory_space<any>> -> memref<1x32xf32, #tpu.memory_space<any>>
    %c0_i32_68 = arith.constant 0 : i32
    %162 = tpu.memref_slice %arg8[%c7_i32, %c0_i32_68] : memref<8x32xf32, #tpu.memory_space<vmem>> -> memref<1x32xf32, #tpu.memory_space<vmem>>
    %163 = tpu.memref_slice %arg10[%c1_i32_66] : memref<3x!tpu.dma_semaphore, #tpu.memory_space<semaphore_mem>> -> memref<1x!tpu.dma_semaphore, #tpu.memory_space<semaphore_mem>>
    %164 = tpu.memref_squeeze %163 : memref<1x!tpu.dma_semaphore, #tpu.memory_space<semaphore_mem>> -> memref<!tpu.dma_semaphore, #tpu.memory_space<semaphore_mem>>
    tpu.enqueue_dma source(%161 : memref<1x32xf32, #tpu.memory_space<any>>) target(%162 : memref<1x32xf32, #tpu.memory_space<vmem>>) target_semaphore(%164 : memref<!tpu.dma_semaphore, #tpu.memory_space<semaphore_mem>>)
    %c2_i32_69 = arith.constant 2 : i32
    %c0_i32_70 = arith.constant 0 : i32
    %165 = tpu.memref_slice %arg5[%156, %c0_i32_70] : memref<32x32xf32, #tpu.memory_space<any>> -> memref<1x32xf32, #tpu.memory_space<any>>
    %c0_i32_71 = arith.constant 0 : i32
    %166 = tpu.memref_slice %arg9[%c7_i32, %c0_i32_71] : memref<8x32xf32, #tpu.memory_space<vmem>> -> memref<1x32xf32, #tpu.memory_space<vmem>>
    %167 = tpu.memref_slice %arg10[%c2_i32_69] : memref<3x!tpu.dma_semaphore, #tpu.memory_space<semaphore_mem>> -> memref<1x!tpu.dma_semaphore, #tpu.memory_space<semaphore_mem>>
    %168 = tpu.memref_squeeze %167 : memref<1x!tpu.dma_semaphore, #tpu.memory_space<semaphore_mem>> -> memref<!tpu.dma_semaphore, #tpu.memory_space<semaphore_mem>>
    tpu.enqueue_dma source(%165 : memref<1x32xf32, #tpu.memory_space<any>>) target(%166 : memref<1x32xf32, #tpu.memory_space<vmem>>) target_semaphore(%168 : memref<!tpu.dma_semaphore, #tpu.memory_space<semaphore_mem>>)
    %c8_i32_72 = arith.constant 8 : i32
    %c0_i32_73 = arith.constant 0 : i32
    %c0_i32_74 = arith.constant 0 : i32
    %c0_i32_75 = arith.constant 0 : i32
    %c0_i32_76 = arith.constant 0 : i32
    %169 = tpu.memref_slice %arg4[%c0_i32_75, %c0_i32_76] : memref<16x32xf32, #tpu.memory_space<any>> -> memref<1x32xf32, #tpu.memory_space<any>>
    %c0_i32_77 = arith.constant 0 : i32
    %170 = tpu.memref_slice %arg7[%c0_i32_73, %c0_i32_77] : memref<8x32xf32, #tpu.memory_space<vmem>> -> memref<1x32xf32, #tpu.memory_space<vmem>>
    %171 = tpu.memref_slice %arg10[%c0_i32_74] : memref<3x!tpu.dma_semaphore, #tpu.memory_space<semaphore_mem>> -> memref<1x!tpu.dma_semaphore, #tpu.memory_space<semaphore_mem>>
    %172 = tpu.memref_squeeze %171 : memref<1x!tpu.dma_semaphore, #tpu.memory_space<semaphore_mem>> -> memref<!tpu.dma_semaphore, #tpu.memory_space<semaphore_mem>>
    tpu.wait_dma2 semaphore(%172 : memref<!tpu.dma_semaphore, #tpu.memory_space<semaphore_mem>>) src(%169 : memref<1x32xf32, #tpu.memory_space<any>>) dst(%170 : memref<1x32xf32, #tpu.memory_space<vmem>>)
    %c1_i32_78 = arith.constant 1 : i32
    %c0_i32_79 = arith.constant 0 : i32
    %c0_i32_80 = arith.constant 0 : i32
    %173 = tpu.memref_slice %arg5[%c0_i32_79, %c0_i32_80] : memref<32x32xf32, #tpu.memory_space<any>> -> memref<1x32xf32, #tpu.memory_space<any>>
    %c0_i32_81 = arith.constant 0 : i32
    %174 = tpu.memref_slice %arg8[%c0_i32_73, %c0_i32_81] : memref<8x32xf32, #tpu.memory_space<vmem>> -> memref<1x32xf32, #tpu.memory_space<vmem>>
    %175 = tpu.memref_slice %arg10[%c1_i32_78] : memref<3x!tpu.dma_semaphore, #tpu.memory_space<semaphore_mem>> -> memref<1x!tpu.dma_semaphore, #tpu.memory_space<semaphore_mem>>
    %176 = tpu.memref_squeeze %175 : memref<1x!tpu.dma_semaphore, #tpu.memory_space<semaphore_mem>> -> memref<!tpu.dma_semaphore, #tpu.memory_space<semaphore_mem>>
    tpu.wait_dma2 semaphore(%176 : memref<!tpu.dma_semaphore, #tpu.memory_space<semaphore_mem>>) src(%173 : memref<1x32xf32, #tpu.memory_space<any>>) dst(%174 : memref<1x32xf32, #tpu.memory_space<vmem>>)
    %c2_i32_82 = arith.constant 2 : i32
    %c0_i32_83 = arith.constant 0 : i32
    %c0_i32_84 = arith.constant 0 : i32
    %177 = tpu.memref_slice %arg5[%c0_i32_83, %c0_i32_84] : memref<32x32xf32, #tpu.memory_space<any>> -> memref<1x32xf32, #tpu.memory_space<any>>
    %c0_i32_85 = arith.constant 0 : i32
    %178 = tpu.memref_slice %arg9[%c0_i32_73, %c0_i32_85] : memref<8x32xf32, #tpu.memory_space<vmem>> -> memref<1x32xf32, #tpu.memory_space<vmem>>
    %179 = tpu.memref_slice %arg10[%c2_i32_82] : memref<3x!tpu.dma_semaphore, #tpu.memory_space<semaphore_mem>> -> memref<1x!tpu.dma_semaphore, #tpu.memory_space<semaphore_mem>>
    %180 = tpu.memref_squeeze %179 : memref<1x!tpu.dma_semaphore, #tpu.memory_space<semaphore_mem>> -> memref<!tpu.dma_semaphore, #tpu.memory_space<semaphore_mem>>
    tpu.wait_dma2 semaphore(%180 : memref<!tpu.dma_semaphore, #tpu.memory_space<semaphore_mem>>) src(%177 : memref<1x32xf32, #tpu.memory_space<any>>) dst(%178 : memref<1x32xf32, #tpu.memory_space<vmem>>)
    %c1_i32_86 = arith.constant 1 : i32
    %c0_i32_87 = arith.constant 0 : i32
    %c0_i32_88 = arith.constant 0 : i32
    %c0_i32_89 = arith.constant 0 : i32
    %181 = tpu.memref_slice %arg4[%c0_i32_88, %c0_i32_89] : memref<16x32xf32, #tpu.memory_space<any>> -> memref<1x32xf32, #tpu.memory_space<any>>
    %c0_i32_90 = arith.constant 0 : i32
    %182 = tpu.memref_slice %arg7[%c1_i32_86, %c0_i32_90] : memref<8x32xf32, #tpu.memory_space<vmem>> -> memref<1x32xf32, #tpu.memory_space<vmem>>
    %183 = tpu.memref_slice %arg10[%c0_i32_87] : memref<3x!tpu.dma_semaphore, #tpu.memory_space<semaphore_mem>> -> memref<1x!tpu.dma_semaphore, #tpu.memory_space<semaphore_mem>>
    %184 = tpu.memref_squeeze %183 : memref<1x!tpu.dma_semaphore, #tpu.memory_space<semaphore_mem>> -> memref<!tpu.dma_semaphore, #tpu.memory_space<semaphore_mem>>
    tpu.wait_dma2 semaphore(%184 : memref<!tpu.dma_semaphore, #tpu.memory_space<semaphore_mem>>) src(%181 : memref<1x32xf32, #tpu.memory_space<any>>) dst(%182 : memref<1x32xf32, #tpu.memory_space<vmem>>)
    %c1_i32_91 = arith.constant 1 : i32
    %c0_i32_92 = arith.constant 0 : i32
    %c0_i32_93 = arith.constant 0 : i32
    %185 = tpu.memref_slice %arg5[%c0_i32_92, %c0_i32_93] : memref<32x32xf32, #tpu.memory_space<any>> -> memref<1x32xf32, #tpu.memory_space<any>>
    %c0_i32_94 = arith.constant 0 : i32
    %186 = tpu.memref_slice %arg8[%c1_i32_86, %c0_i32_94] : memref<8x32xf32, #tpu.memory_space<vmem>> -> memref<1x32xf32, #tpu.memory_space<vmem>>
    %187 = tpu.memref_slice %arg10[%c1_i32_91] : memref<3x!tpu.dma_semaphore, #tpu.memory_space<semaphore_mem>> -> memref<1x!tpu.dma_semaphore, #tpu.memory_space<semaphore_mem>>
    %188 = tpu.memref_squeeze %187 : memref<1x!tpu.dma_semaphore, #tpu.memory_space<semaphore_mem>> -> memref<!tpu.dma_semaphore, #tpu.memory_space<semaphore_mem>>
    tpu.wait_dma2 semaphore(%188 : memref<!tpu.dma_semaphore, #tpu.memory_space<semaphore_mem>>) src(%185 : memref<1x32xf32, #tpu.memory_space<any>>) dst(%186 : memref<1x32xf32, #tpu.memory_space<vmem>>)
    %c2_i32_95 = arith.constant 2 : i32
    %c0_i32_96 = arith.constant 0 : i32
    %c0_i32_97 = arith.constant 0 : i32
    %189 = tpu.memref_slice %arg5[%c0_i32_96, %c0_i32_97] : memref<32x32xf32, #tpu.memory_space<any>> -> memref<1x32xf32, #tpu.memory_space<any>>
    %c0_i32_98 = arith.constant 0 : i32
    %190 = tpu.memref_slice %arg9[%c1_i32_86, %c0_i32_98] : memref<8x32xf32, #tpu.memory_space<vmem>> -> memref<1x32xf32, #tpu.memory_space<vmem>>
    %191 = tpu.memref_slice %arg10[%c2_i32_95] : memref<3x!tpu.dma_semaphore, #tpu.memory_space<semaphore_mem>> -> memref<1x!tpu.dma_semaphore, #tpu.memory_space<semaphore_mem>>
    %192 = tpu.memref_squeeze %191 : memref<1x!tpu.dma_semaphore, #tpu.memory_space<semaphore_mem>> -> memref<!tpu.dma_semaphore, #tpu.memory_space<semaphore_mem>>
    tpu.wait_dma2 semaphore(%192 : memref<!tpu.dma_semaphore, #tpu.memory_space<semaphore_mem>>) src(%189 : memref<1x32xf32, #tpu.memory_space<any>>) dst(%190 : memref<1x32xf32, #tpu.memory_space<vmem>>)
    %c2_i32_99 = arith.constant 2 : i32
    %c0_i32_100 = arith.constant 0 : i32
    %c0_i32_101 = arith.constant 0 : i32
    %c0_i32_102 = arith.constant 0 : i32
    %193 = tpu.memref_slice %arg4[%c0_i32_101, %c0_i32_102] : memref<16x32xf32, #tpu.memory_space<any>> -> memref<1x32xf32, #tpu.memory_space<any>>
    %c0_i32_103 = arith.constant 0 : i32
    %194 = tpu.memref_slice %arg7[%c2_i32_99, %c0_i32_103] : memref<8x32xf32, #tpu.memory_space<vmem>> -> memref<1x32xf32, #tpu.memory_space<vmem>>
    %195 = tpu.memref_slice %arg10[%c0_i32_100] : memref<3x!tpu.dma_semaphore, #tpu.memory_space<semaphore_mem>> -> memref<1x!tpu.dma_semaphore, #tpu.memory_space<semaphore_mem>>
    %196 = tpu.memref_squeeze %195 : memref<1x!tpu.dma_semaphore, #tpu.memory_space<semaphore_mem>> -> memref<!tpu.dma_semaphore, #tpu.memory_space<semaphore_mem>>
    tpu.wait_dma2 semaphore(%196 : memref<!tpu.dma_semaphore, #tpu.memory_space<semaphore_mem>>) src(%193 : memref<1x32xf32, #tpu.memory_space<any>>) dst(%194 : memref<1x32xf32, #tpu.memory_space<vmem>>)
    %c1_i32_104 = arith.constant 1 : i32
    %c0_i32_105 = arith.constant 0 : i32
    %c0_i32_106 = arith.constant 0 : i32
    %197 = tpu.memref_slice %arg5[%c0_i32_105, %c0_i32_106] : memref<32x32xf32, #tpu.memory_space<any>> -> memref<1x32xf32, #tpu.memory_space<any>>
    %c0_i32_107 = arith.constant 0 : i32
    %198 = tpu.memref_slice %arg8[%c2_i32_99, %c0_i32_107] : memref<8x32xf32, #tpu.memory_space<vmem>> -> memref<1x32xf32, #tpu.memory_space<vmem>>
    %199 = tpu.memref_slice %arg10[%c1_i32_104] : memref<3x!tpu.dma_semaphore, #tpu.memory_space<semaphore_mem>> -> memref<1x!tpu.dma_semaphore, #tpu.memory_space<semaphore_mem>>
    %200 = tpu.memref_squeeze %199 : memref<1x!tpu.dma_semaphore, #tpu.memory_space<semaphore_mem>> -> memref<!tpu.dma_semaphore, #tpu.memory_space<semaphore_mem>>
    tpu.wait_dma2 semaphore(%200 : memref<!tpu.dma_semaphore, #tpu.memory_space<semaphore_mem>>) src(%197 : memref<1x32xf32, #tpu.memory_space<any>>) dst(%198 : memref<1x32xf32, #tpu.memory_space<vmem>>)
    %c2_i32_108 = arith.constant 2 : i32
    %c0_i32_109 = arith.constant 0 : i32
    %c0_i32_110 = arith.constant 0 : i32
    %201 = tpu.memref_slice %arg5[%c0_i32_109, %c0_i32_110] : memref<32x32xf32, #tpu.memory_space<any>> -> memref<1x32xf32, #tpu.memory_space<any>>
    %c0_i32_111 = arith.constant 0 : i32
    %202 = tpu.memref_slice %arg9[%c2_i32_99, %c0_i32_111] : memref<8x32xf32, #tpu.memory_space<vmem>> -> memref<1x32xf32, #tpu.memory_space<vmem>>
    %203 = tpu.memref_slice %arg10[%c2_i32_108] : memref<3x!tpu.dma_semaphore, #tpu.memory_space<semaphore_mem>> -> memref<1x!tpu.dma_semaphore, #tpu.memory_space<semaphore_mem>>
    %204 = tpu.memref_squeeze %203 : memref<1x!tpu.dma_semaphore, #tpu.memory_space<semaphore_mem>> -> memref<!tpu.dma_semaphore, #tpu.memory_space<semaphore_mem>>
    tpu.wait_dma2 semaphore(%204 : memref<!tpu.dma_semaphore, #tpu.memory_space<semaphore_mem>>) src(%201 : memref<1x32xf32, #tpu.memory_space<any>>) dst(%202 : memref<1x32xf32, #tpu.memory_space<vmem>>)
    %c3_i32_112 = arith.constant 3 : i32
    %c0_i32_113 = arith.constant 0 : i32
    %c0_i32_114 = arith.constant 0 : i32
    %c0_i32_115 = arith.constant 0 : i32
    %205 = tpu.memref_slice %arg4[%c0_i32_114, %c0_i32_115] : memref<16x32xf32, #tpu.memory_space<any>> -> memref<1x32xf32, #tpu.memory_space<any>>
    %c0_i32_116 = arith.constant 0 : i32
    %206 = tpu.memref_slice %arg7[%c3_i32_112, %c0_i32_116] : memref<8x32xf32, #tpu.memory_space<vmem>> -> memref<1x32xf32, #tpu.memory_space<vmem>>
    %207 = tpu.memref_slice %arg10[%c0_i32_113] : memref<3x!tpu.dma_semaphore, #tpu.memory_space<semaphore_mem>> -> memref<1x!tpu.dma_semaphore, #tpu.memory_space<semaphore_mem>>
    %208 = tpu.memref_squeeze %207 : memref<1x!tpu.dma_semaphore, #tpu.memory_space<semaphore_mem>> -> memref<!tpu.dma_semaphore, #tpu.memory_space<semaphore_mem>>
    tpu.wait_dma2 semaphore(%208 : memref<!tpu.dma_semaphore, #tpu.memory_space<semaphore_mem>>) src(%205 : memref<1x32xf32, #tpu.memory_space<any>>) dst(%206 : memref<1x32xf32, #tpu.memory_space<vmem>>)
    %c1_i32_117 = arith.constant 1 : i32
    %c0_i32_118 = arith.constant 0 : i32
    %c0_i32_119 = arith.constant 0 : i32
    %209 = tpu.memref_slice %arg5[%c0_i32_118, %c0_i32_119] : memref<32x32xf32, #tpu.memory_space<any>> -> memref<1x32xf32, #tpu.memory_space<any>>
    %c0_i32_120 = arith.constant 0 : i32
    %210 = tpu.memref_slice %arg8[%c3_i32_112, %c0_i32_120] : memref<8x32xf32, #tpu.memory_space<vmem>> -> memref<1x32xf32, #tpu.memory_space<vmem>>
    %211 = tpu.memref_slice %arg10[%c1_i32_117] : memref<3x!tpu.dma_semaphore, #tpu.memory_space<semaphore_mem>> -> memref<1x!tpu.dma_semaphore, #tpu.memory_space<semaphore_mem>>
    %212 = tpu.memref_squeeze %211 : memref<1x!tpu.dma_semaphore, #tpu.memory_space<semaphore_mem>> -> memref<!tpu.dma_semaphore, #tpu.memory_space<semaphore_mem>>
    tpu.wait_dma2 semaphore(%212 : memref<!tpu.dma_semaphore, #tpu.memory_space<semaphore_mem>>) src(%209 : memref<1x32xf32, #tpu.memory_space<any>>) dst(%210 : memref<1x32xf32, #tpu.memory_space<vmem>>)
    %c2_i32_121 = arith.constant 2 : i32
    %c0_i32_122 = arith.constant 0 : i32
    %c0_i32_123 = arith.constant 0 : i32
    %213 = tpu.memref_slice %arg5[%c0_i32_122, %c0_i32_123] : memref<32x32xf32, #tpu.memory_space<any>> -> memref<1x32xf32, #tpu.memory_space<any>>
    %c0_i32_124 = arith.constant 0 : i32
    %214 = tpu.memref_slice %arg9[%c3_i32_112, %c0_i32_124] : memref<8x32xf32, #tpu.memory_space<vmem>> -> memref<1x32xf32, #tpu.memory_space<vmem>>
    %215 = tpu.memref_slice %arg10[%c2_i32_121] : memref<3x!tpu.dma_semaphore, #tpu.memory_space<semaphore_mem>> -> memref<1x!tpu.dma_semaphore, #tpu.memory_space<semaphore_mem>>
    %216 = tpu.memref_squeeze %215 : memref<1x!tpu.dma_semaphore, #tpu.memory_space<semaphore_mem>> -> memref<!tpu.dma_semaphore, #tpu.memory_space<semaphore_mem>>
    tpu.wait_dma2 semaphore(%216 : memref<!tpu.dma_semaphore, #tpu.memory_space<semaphore_mem>>) src(%213 : memref<1x32xf32, #tpu.memory_space<any>>) dst(%214 : memref<1x32xf32, #tpu.memory_space<vmem>>)
    %c4_i32_125 = arith.constant 4 : i32
    %c0_i32_126 = arith.constant 0 : i32
    %c0_i32_127 = arith.constant 0 : i32
    %c0_i32_128 = arith.constant 0 : i32
    %217 = tpu.memref_slice %arg4[%c0_i32_127, %c0_i32_128] : memref<16x32xf32, #tpu.memory_space<any>> -> memref<1x32xf32, #tpu.memory_space<any>>
    %c0_i32_129 = arith.constant 0 : i32
    %218 = tpu.memref_slice %arg7[%c4_i32_125, %c0_i32_129] : memref<8x32xf32, #tpu.memory_space<vmem>> -> memref<1x32xf32, #tpu.memory_space<vmem>>
    %219 = tpu.memref_slice %arg10[%c0_i32_126] : memref<3x!tpu.dma_semaphore, #tpu.memory_space<semaphore_mem>> -> memref<1x!tpu.dma_semaphore, #tpu.memory_space<semaphore_mem>>
    %220 = tpu.memref_squeeze %219 : memref<1x!tpu.dma_semaphore, #tpu.memory_space<semaphore_mem>> -> memref<!tpu.dma_semaphore, #tpu.memory_space<semaphore_mem>>
    tpu.wait_dma2 semaphore(%220 : memref<!tpu.dma_semaphore, #tpu.memory_space<semaphore_mem>>) src(%217 : memref<1x32xf32, #tpu.memory_space<any>>) dst(%218 : memref<1x32xf32, #tpu.memory_space<vmem>>)
    %c1_i32_130 = arith.constant 1 : i32
    %c0_i32_131 = arith.constant 0 : i32
    %c0_i32_132 = arith.constant 0 : i32
    %221 = tpu.memref_slice %arg5[%c0_i32_131, %c0_i32_132] : memref<32x32xf32, #tpu.memory_space<any>> -> memref<1x32xf32, #tpu.memory_space<any>>
    %c0_i32_133 = arith.constant 0 : i32
    %222 = tpu.memref_slice %arg8[%c4_i32_125, %c0_i32_133] : memref<8x32xf32, #tpu.memory_space<vmem>> -> memref<1x32xf32, #tpu.memory_space<vmem>>
    %223 = tpu.memref_slice %arg10[%c1_i32_130] : memref<3x!tpu.dma_semaphore, #tpu.memory_space<semaphore_mem>> -> memref<1x!tpu.dma_semaphore, #tpu.memory_space<semaphore_mem>>
    %224 = tpu.memref_squeeze %223 : memref<1x!tpu.dma_semaphore, #tpu.memory_space<semaphore_mem>> -> memref<!tpu.dma_semaphore, #tpu.memory_space<semaphore_mem>>
    tpu.wait_dma2 semaphore(%224 : memref<!tpu.dma_semaphore, #tpu.memory_space<semaphore_mem>>) src(%221 : memref<1x32xf32, #tpu.memory_space<any>>) dst(%222 : memref<1x32xf32, #tpu.memory_space<vmem>>)
    %c2_i32_134 = arith.constant 2 : i32
    %c0_i32_135 = arith.constant 0 : i32
    %c0_i32_136 = arith.constant 0 : i32
    %225 = tpu.memref_slice %arg5[%c0_i32_135, %c0_i32_136] : memref<32x32xf32, #tpu.memory_space<any>> -> memref<1x32xf32, #tpu.memory_space<any>>
    %c0_i32_137 = arith.constant 0 : i32
    %226 = tpu.memref_slice %arg9[%c4_i32_125, %c0_i32_137] : memref<8x32xf32, #tpu.memory_space<vmem>> -> memref<1x32xf32, #tpu.memory_space<vmem>>
    %227 = tpu.memref_slice %arg10[%c2_i32_134] : memref<3x!tpu.dma_semaphore, #tpu.memory_space<semaphore_mem>> -> memref<1x!tpu.dma_semaphore, #tpu.memory_space<semaphore_mem>>
    %228 = tpu.memref_squeeze %227 : memref<1x!tpu.dma_semaphore, #tpu.memory_space<semaphore_mem>> -> memref<!tpu.dma_semaphore, #tpu.memory_space<semaphore_mem>>
    tpu.wait_dma2 semaphore(%228 : memref<!tpu.dma_semaphore, #tpu.memory_space<semaphore_mem>>) src(%225 : memref<1x32xf32, #tpu.memory_space<any>>) dst(%226 : memref<1x32xf32, #tpu.memory_space<vmem>>)
    %c5_i32_138 = arith.constant 5 : i32
    %c0_i32_139 = arith.constant 0 : i32
    %c0_i32_140 = arith.constant 0 : i32
    %c0_i32_141 = arith.constant 0 : i32
    %229 = tpu.memref_slice %arg4[%c0_i32_140, %c0_i32_141] : memref<16x32xf32, #tpu.memory_space<any>> -> memref<1x32xf32, #tpu.memory_space<any>>
    %c0_i32_142 = arith.constant 0 : i32
    %230 = tpu.memref_slice %arg7[%c5_i32_138, %c0_i32_142] : memref<8x32xf32, #tpu.memory_space<vmem>> -> memref<1x32xf32, #tpu.memory_space<vmem>>
    %231 = tpu.memref_slice %arg10[%c0_i32_139] : memref<3x!tpu.dma_semaphore, #tpu.memory_space<semaphore_mem>> -> memref<1x!tpu.dma_semaphore, #tpu.memory_space<semaphore_mem>>
    %232 = tpu.memref_squeeze %231 : memref<1x!tpu.dma_semaphore, #tpu.memory_space<semaphore_mem>> -> memref<!tpu.dma_semaphore, #tpu.memory_space<semaphore_mem>>
    tpu.wait_dma2 semaphore(%232 : memref<!tpu.dma_semaphore, #tpu.memory_space<semaphore_mem>>) src(%229 : memref<1x32xf32, #tpu.memory_space<any>>) dst(%230 : memref<1x32xf32, #tpu.memory_space<vmem>>)
    %c1_i32_143 = arith.constant 1 : i32
    %c0_i32_144 = arith.constant 0 : i32
    %c0_i32_145 = arith.constant 0 : i32
    %233 = tpu.memref_slice %arg5[%c0_i32_144, %c0_i32_145] : memref<32x32xf32, #tpu.memory_space<any>> -> memref<1x32xf32, #tpu.memory_space<any>>
    %c0_i32_146 = arith.constant 0 : i32
    %234 = tpu.memref_slice %arg8[%c5_i32_138, %c0_i32_146] : memref<8x32xf32, #tpu.memory_space<vmem>> -> memref<1x32xf32, #tpu.memory_space<vmem>>
    %235 = tpu.memref_slice %arg10[%c1_i32_143] : memref<3x!tpu.dma_semaphore, #tpu.memory_space<semaphore_mem>> -> memref<1x!tpu.dma_semaphore, #tpu.memory_space<semaphore_mem>>
    %236 = tpu.memref_squeeze %235 : memref<1x!tpu.dma_semaphore, #tpu.memory_space<semaphore_mem>> -> memref<!tpu.dma_semaphore, #tpu.memory_space<semaphore_mem>>
    tpu.wait_dma2 semaphore(%236 : memref<!tpu.dma_semaphore, #tpu.memory_space<semaphore_mem>>) src(%233 : memref<1x32xf32, #tpu.memory_space<any>>) dst(%234 : memref<1x32xf32, #tpu.memory_space<vmem>>)
    %c2_i32_147 = arith.constant 2 : i32
    %c0_i32_148 = arith.constant 0 : i32
    %c0_i32_149 = arith.constant 0 : i32
    %237 = tpu.memref_slice %arg5[%c0_i32_148, %c0_i32_149] : memref<32x32xf32, #tpu.memory_space<any>> -> memref<1x32xf32, #tpu.memory_space<any>>
    %c0_i32_150 = arith.constant 0 : i32
    %238 = tpu.memref_slice %arg9[%c5_i32_138, %c0_i32_150] : memref<8x32xf32, #tpu.memory_space<vmem>> -> memref<1x32xf32, #tpu.memory_space<vmem>>
    %239 = tpu.memref_slice %arg10[%c2_i32_147] : memref<3x!tpu.dma_semaphore, #tpu.memory_space<semaphore_mem>> -> memref<1x!tpu.dma_semaphore, #tpu.memory_space<semaphore_mem>>
    %240 = tpu.memref_squeeze %239 : memref<1x!tpu.dma_semaphore, #tpu.memory_space<semaphore_mem>> -> memref<!tpu.dma_semaphore, #tpu.memory_space<semaphore_mem>>
    tpu.wait_dma2 semaphore(%240 : memref<!tpu.dma_semaphore, #tpu.memory_space<semaphore_mem>>) src(%237 : memref<1x32xf32, #tpu.memory_space<any>>) dst(%238 : memref<1x32xf32, #tpu.memory_space<vmem>>)
    %c6_i32_151 = arith.constant 6 : i32
    %c0_i32_152 = arith.constant 0 : i32
    %c0_i32_153 = arith.constant 0 : i32
    %c0_i32_154 = arith.constant 0 : i32
    %241 = tpu.memref_slice %arg4[%c0_i32_153, %c0_i32_154] : memref<16x32xf32, #tpu.memory_space<any>> -> memref<1x32xf32, #tpu.memory_space<any>>
    %c0_i32_155 = arith.constant 0 : i32
    %242 = tpu.memref_slice %arg7[%c6_i32_151, %c0_i32_155] : memref<8x32xf32, #tpu.memory_space<vmem>> -> memref<1x32xf32, #tpu.memory_space<vmem>>
    %243 = tpu.memref_slice %arg10[%c0_i32_152] : memref<3x!tpu.dma_semaphore, #tpu.memory_space<semaphore_mem>> -> memref<1x!tpu.dma_semaphore, #tpu.memory_space<semaphore_mem>>
    %244 = tpu.memref_squeeze %243 : memref<1x!tpu.dma_semaphore, #tpu.memory_space<semaphore_mem>> -> memref<!tpu.dma_semaphore, #tpu.memory_space<semaphore_mem>>
    tpu.wait_dma2 semaphore(%244 : memref<!tpu.dma_semaphore, #tpu.memory_space<semaphore_mem>>) src(%241 : memref<1x32xf32, #tpu.memory_space<any>>) dst(%242 : memref<1x32xf32, #tpu.memory_space<vmem>>)
    %c1_i32_156 = arith.constant 1 : i32
    %c0_i32_157 = arith.constant 0 : i32
    %c0_i32_158 = arith.constant 0 : i32
    %245 = tpu.memref_slice %arg5[%c0_i32_157, %c0_i32_158] : memref<32x32xf32, #tpu.memory_space<any>> -> memref<1x32xf32, #tpu.memory_space<any>>
    %c0_i32_159 = arith.constant 0 : i32
    %246 = tpu.memref_slice %arg8[%c6_i32_151, %c0_i32_159] : memref<8x32xf32, #tpu.memory_space<vmem>> -> memref<1x32xf32, #tpu.memory_space<vmem>>
    %247 = tpu.memref_slice %arg10[%c1_i32_156] : memref<3x!tpu.dma_semaphore, #tpu.memory_space<semaphore_mem>> -> memref<1x!tpu.dma_semaphore, #tpu.memory_space<semaphore_mem>>
    %248 = tpu.memref_squeeze %247 : memref<1x!tpu.dma_semaphore, #tpu.memory_space<semaphore_mem>> -> memref<!tpu.dma_semaphore, #tpu.memory_space<semaphore_mem>>
    tpu.wait_dma2 semaphore(%248 : memref<!tpu.dma_semaphore, #tpu.memory_space<semaphore_mem>>) src(%245 : memref<1x32xf32, #tpu.memory_space<any>>) dst(%246 : memref<1x32xf32, #tpu.memory_space<vmem>>)
    %c2_i32_160 = arith.constant 2 : i32
    %c0_i32_161 = arith.constant 0 : i32
    %c0_i32_162 = arith.constant 0 : i32
    %249 = tpu.memref_slice %arg5[%c0_i32_161, %c0_i32_162] : memref<32x32xf32, #tpu.memory_space<any>> -> memref<1x32xf32, #tpu.memory_space<any>>
    %c0_i32_163 = arith.constant 0 : i32
    %250 = tpu.memref_slice %arg9[%c6_i32_151, %c0_i32_163] : memref<8x32xf32, #tpu.memory_space<vmem>> -> memref<1x32xf32, #tpu.memory_space<vmem>>
    %251 = tpu.memref_slice %arg10[%c2_i32_160] : memref<3x!tpu.dma_semaphore, #tpu.memory_space<semaphore_mem>> -> memref<1x!tpu.dma_semaphore, #tpu.memory_space<semaphore_mem>>
    %252 = tpu.memref_squeeze %251 : memref<1x!tpu.dma_semaphore, #tpu.memory_space<semaphore_mem>> -> memref<!tpu.dma_semaphore, #tpu.memory_space<semaphore_mem>>
    tpu.wait_dma2 semaphore(%252 : memref<!tpu.dma_semaphore, #tpu.memory_space<semaphore_mem>>) src(%249 : memref<1x32xf32, #tpu.memory_space<any>>) dst(%250 : memref<1x32xf32, #tpu.memory_space<vmem>>)
    %c7_i32_164 = arith.constant 7 : i32
    %c0_i32_165 = arith.constant 0 : i32
    %c0_i32_166 = arith.constant 0 : i32
    %c0_i32_167 = arith.constant 0 : i32
    %253 = tpu.memref_slice %arg4[%c0_i32_166, %c0_i32_167] : memref<16x32xf32, #tpu.memory_space<any>> -> memref<1x32xf32, #tpu.memory_space<any>>
    %c0_i32_168 = arith.constant 0 : i32
    %254 = tpu.memref_slice %arg7[%c7_i32_164, %c0_i32_168] : memref<8x32xf32, #tpu.memory_space<vmem>> -> memref<1x32xf32, #tpu.memory_space<vmem>>
    %255 = tpu.memref_slice %arg10[%c0_i32_165] : memref<3x!tpu.dma_semaphore, #tpu.memory_space<semaphore_mem>> -> memref<1x!tpu.dma_semaphore, #tpu.memory_space<semaphore_mem>>
    %256 = tpu.memref_squeeze %255 : memref<1x!tpu.dma_semaphore, #tpu.memory_space<semaphore_mem>> -> memref<!tpu.dma_semaphore, #tpu.memory_space<semaphore_mem>>
    tpu.wait_dma2 semaphore(%256 : memref<!tpu.dma_semaphore, #tpu.memory_space<semaphore_mem>>) src(%253 : memref<1x32xf32, #tpu.memory_space<any>>) dst(%254 : memref<1x32xf32, #tpu.memory_space<vmem>>)
    %c1_i32_169 = arith.constant 1 : i32
    %c0_i32_170 = arith.constant 0 : i32
    %c0_i32_171 = arith.constant 0 : i32
    %257 = tpu.memref_slice %arg5[%c0_i32_170, %c0_i32_171] : memref<32x32xf32, #tpu.memory_space<any>> -> memref<1x32xf32, #tpu.memory_space<any>>
    %c0_i32_172 = arith.constant 0 : i32
    %258 = tpu.memref_slice %arg8[%c7_i32_164, %c0_i32_172] : memref<8x32xf32, #tpu.memory_space<vmem>> -> memref<1x32xf32, #tpu.memory_space<vmem>>
    %259 = tpu.memref_slice %arg10[%c1_i32_169] : memref<3x!tpu.dma_semaphore, #tpu.memory_space<semaphore_mem>> -> memref<1x!tpu.dma_semaphore, #tpu.memory_space<semaphore_mem>>
    %260 = tpu.memref_squeeze %259 : memref<1x!tpu.dma_semaphore, #tpu.memory_space<semaphore_mem>> -> memref<!tpu.dma_semaphore, #tpu.memory_space<semaphore_mem>>
    tpu.wait_dma2 semaphore(%260 : memref<!tpu.dma_semaphore, #tpu.memory_space<semaphore_mem>>) src(%257 : memref<1x32xf32, #tpu.memory_space<any>>) dst(%258 : memref<1x32xf32, #tpu.memory_space<vmem>>)
    %c2_i32_173 = arith.constant 2 : i32
    %c0_i32_174 = arith.constant 0 : i32
    %c0_i32_175 = arith.constant 0 : i32
    %261 = tpu.memref_slice %arg5[%c0_i32_174, %c0_i32_175] : memref<32x32xf32, #tpu.memory_space<any>> -> memref<1x32xf32, #tpu.memory_space<any>>
    %c0_i32_176 = arith.constant 0 : i32
    %262 = tpu.memref_slice %arg9[%c7_i32_164, %c0_i32_176] : memref<8x32xf32, #tpu.memory_space<vmem>> -> memref<1x32xf32, #tpu.memory_space<vmem>>
    %263 = tpu.memref_slice %arg10[%c2_i32_173] : memref<3x!tpu.dma_semaphore, #tpu.memory_space<semaphore_mem>> -> memref<1x!tpu.dma_semaphore, #tpu.memory_space<semaphore_mem>>
    %264 = tpu.memref_squeeze %263 : memref<1x!tpu.dma_semaphore, #tpu.memory_space<semaphore_mem>> -> memref<!tpu.dma_semaphore, #tpu.memory_space<semaphore_mem>>
    tpu.wait_dma2 semaphore(%264 : memref<!tpu.dma_semaphore, #tpu.memory_space<semaphore_mem>>) src(%261 : memref<1x32xf32, #tpu.memory_space<any>>) dst(%262 : memref<1x32xf32, #tpu.memory_space<vmem>>)
    %c8_i32_177 = arith.constant 8 : i32
    %c0 = arith.constant 0 : index
    %c0_178 = arith.constant 0 : index
    %265 = vector.load %arg7[%c0, %c0_178] : memref<8x32xf32, #tpu.memory_space<vmem>>, vector<8x32xf32>
    %c0_179 = arith.constant 0 : index
    %c0_180 = arith.constant 0 : index
    %266 = vector.load %arg8[%c0_179, %c0_180] : memref<8x32xf32, #tpu.memory_space<vmem>>, vector<8x32xf32>
    %c0_181 = arith.constant 0 : index
    %c0_182 = arith.constant 0 : index
    %267 = vector.load %arg9[%c0_181, %c0_182] : memref<8x32xf32, #tpu.memory_space<vmem>>, vector<8x32xf32>
    %268 = arith.subf %266, %267 : vector<8x32xf32>
    %269 = arith.mulf %265, %268 : vector<8x32xf32>
    %cst = arith.constant 1.000000e+00 : f32
    %270 = vector.broadcast %cst : f32 to vector<32x128xf32>
    %cst_183 = arith.constant dense<0.000000e+00> : vector<8x128xf32>
    %271 = tpu.matmul %269, %270, %cst_183 {dimension_numbers = #tpu.dot_dimension_numbers<[1], [0], [0], [1], [0, 0, 1, 1], [], []>} : vector<8x32xf32>, vector<32x128xf32>, vector<8x128xf32> -> vector<8x128xf32>
    %272 = vector.extract_strided_slice %271 {offsets = [0, 0], sizes = [8, 1], strides = [1, 1]} : vector<8x128xf32> to vector<8x1xf32>
    %cst_184 = arith.constant 0.000000e+00 : f32
    %273 = vector.broadcast %cst_184 : f32 to vector<8x1xf32>
    %274 = arith.minimumf %272, %273 : vector<8x1xf32>
    %275 = math.absf %272 : vector<8x1xf32>
    %cst_185 = arith.constant 0.000000e+00 : f32
    %276 = vector.broadcast %cst_185 : f32 to vector<8x1xf32>
    %277 = arith.subf %276, %275 : vector<8x1xf32>
    %278 = math.exp %277 : vector<8x1xf32>
    %cst_186 = arith.constant 1.000000e+00 : f32
    %279 = vector.broadcast %cst_186 : f32 to vector<8x1xf32>
    %280 = arith.addf %279, %278 : vector<8x1xf32>
    %281 = math.log %280 : vector<8x1xf32>
    %282 = arith.subf %274, %281 : vector<8x1xf32>
    %283 = tpu.iota {dimensions = array<i32: 0>} : vector<8x1xi32>
    %284 = vector.broadcast %0 : i32 to vector<8x1xi32>
    %285 = arith.addi %284, %283 : vector<8x1xi32>
    %c8_i32_187 = arith.constant 8 : i32
    %286 = vector.broadcast %c8_i32_187 : i32 to vector<8x1xi32>
    %287 = arith.cmpi slt, %285, %286 : vector<8x1xi32>
    %cst_188 = arith.constant 0.000000e+00 : f32
    %288 = vector.broadcast %cst_188 : f32 to vector<8x1xf32>
    %289 = arith.select %287, %282, %288 : vector<8x1xi1>, vector<8x1xf32>
    %290 = vector.shape_cast %289 : vector<8x1xf32> to vector<1x8x1xf32>
    %cst_189 = arith.constant dense<0.000000e+00> : vector<1xf32>
    %291 = vector.multi_reduction <add>, %290, %cst_189 [1, 2] : vector<1x8x1xf32> to vector<1xf32>
    %292 = vector.shape_cast %291 : vector<1xf32> to vector<1x1x1xf32>
    %293 = vector.extract %292[0, 0, 0] : f32 from vector<1x1x1xf32>
    %294 = vector.broadcast %293 : f32 to vector<1x8x128xf32>
    %c0_190 = arith.constant 0 : index
    %c0_191 = arith.constant 0 : index
    %c0_192 = arith.constant 0 : index
    %295 = vector.load %arg6[%c0_190, %c0_191, %c0_192] : memref<1x8x128xf32, #tpu.memory_space<vmem>>, vector<1x8x128xf32>
    tpu.vector_store %arg6[%c0_190, %c0_191, %c0_192], %294 {strides = array<i32>} : memref<1x8x128xf32, #tpu.memory_space<vmem>>, vector<1x8x128xf32>,
    return
  }
  func.func @transform_2(%arg0: i32, %arg1: memref<8xi32, #tpu.memory_space<smem>>, %arg2: memref<8xi32, #tpu.memory_space<smem>>, %arg3: memref<8xi32, #tpu.memory_space<smem>>) -> (i32, i32, i32) {
    %c0_i32 = arith.constant 0 : i32
    %c0_i32_0 = arith.constant 0 : i32
    %c0_i32_1 = arith.constant 0 : i32
    return %arg0, %c0_i32, %c0_i32_0 : i32, i32, i32
  }
}

</mosaic_0001>

<llo_original>
// kernel: tpu_custom_call.1
$region0: #{tpu_custom_call.1}
  #allocation0 [shape = 'u32[]', space=smem, size = 0x4, offset = 0x4, fixed_abs, tag = 'smem constant byte address 0x4 - core index']
  #allocation1 [shape = 'u32[72,128]{1,0:T(1,128)}', space=vmem, size = 0x9000, scoped, tag = 'internal scratch']
  #allocation2 [shape = 'f32[8,32]{1,0:T(8,128)}', space=vmem, size = 0x1000, scoped, tag = 'scratch operand']
  #allocation3 [shape = 'f32[8,32]{1,0:T(8,128)}', space=vmem, size = 0x1000, scoped, tag = 'scratch operand']
  #allocation4 [shape = 'f32[8,32]{1,0:T(8,128)}', space=vmem, size = 0x1000, scoped, tag = 'scratch operand']
  #allocation5 [shape = 's32[3]{0}', space=sflag, size = 0xc, scoped, tag = 'scratch operand']
  #allocation6 [shape = 's32[1]{0}', space=sflag, size = 0x4, scoped, tag = 'scoped memory for tpu_custom_call.1']
  #allocation7 [shape = 'u8[512]{0}', space=smem, size = 0x200, scoped, tag = 'prefetched SMEM operand 0']
  #allocation8 [shape = 'u8[512]{0}', space=smem, size = 0x200, scoped, tag = 'prefetched SMEM operand 1']
  #allocation9 [shape = 'u8[512]{0}', space=smem, size = 0x200, scoped, tag = 'prefetched SMEM operand 2']
  #allocation12 [shape = 's32[]', space=sflag, size = 0x4, offset = 0, fixed_abs, tag = 'sflag constant byte address 0x0 - dummy sync flag']
  #allocation13 [shape = 's32[]', space=sflag, size = 0x4, offset = 0, fixed_abs, tag = 'sflag constant byte address 0x0 - dummy sync flag']
  #allocation14 [shape = 'u32[]', space=smem, size = 0x4, offset = 0x44, fixed_abs, tag = 'smem constant byte address 0x44 - assertion arg 0']
  #allocation15 [shape = 'u32[]', space=smem, size = 0x4, offset = 0x48, fixed_abs, tag = 'smem constant byte address 0x48 - assertion arg 1']
  #allocation16 [shape = 's32[]', space=sflag, size = 0x4, offset = 0, fixed_abs, tag = 'sflag constant byte address 0x0 - dummy sync flag']
  #allocation17 [shape = 's32[]', space=sflag, size = 0x4, offset = 0, fixed_abs, tag = 'sflag constant byte address 0x0 - dummy sync flag']
  #allocation18 [shape = 's32[]', space=sflag, size = 0x4, offset = 0, fixed_abs, tag = 'sflag constant byte address 0x0 - dummy sync flag']
  #allocation19 [shape = 's32[]', space=sflag, size = 0x4, offset = 0, fixed_abs, tag = 'sflag constant byte address 0x0 - dummy sync flag']
  #allocation20 [shape = 's32[]', space=sflag, size = 0x4, offset = 0, fixed_abs, tag = 'sflag constant byte address 0x0 - dummy sync flag']
  #allocation21 [shape = 's32[]', space=sflag, size = 0x4, offset = 0, fixed_abs, tag = 'sflag constant byte address 0x0 - dummy sync flag']
  #allocation22 [shape = 's32[]', space=sflag, size = 0x4, offset = 0, fixed_abs, tag = 'sflag constant byte address 0x0 - dummy sync flag']
  #allocation23 [shape = 's32[]', space=sflag, size = 0x4, offset = 0, fixed_abs, tag = 'sflag constant byte address 0x0 - dummy sync flag']
  #allocation24 [shape = 's32[]', space=sflag, size = 0x4, offset = 0, fixed_abs, tag = 'sflag constant byte address 0x0 - dummy sync flag']
  #allocation25 [shape = 's32[]', space=sflag, size = 0x4, offset = 0, fixed_abs, tag = 'sflag constant byte address 0x0 - dummy sync flag']
  #allocation26 [shape = 's32[]', space=sflag, size = 0x4, offset = 0, fixed_abs, tag = 'sflag constant byte address 0x0 - dummy sync flag']
  #allocation27 [shape = 's32[]', space=sflag, size = 0x4, offset = 0, fixed_abs, tag = 'sflag constant byte address 0x0 - dummy sync flag']
  #allocation28 [shape = 's32[]', space=sflag, size = 0x4, offset = 0, fixed_abs, tag = 'sflag constant byte address 0x0 - dummy sync flag']
  #allocation29 [shape = 's32[]', space=sflag, size = 0x4, offset = 0, fixed_abs, tag = 'sflag constant byte address 0x0 - dummy sync flag']
  #allocation30 [shape = 's32[]', space=sflag, size = 0x4, offset = 0, fixed_abs, tag = 'sflag constant byte address 0x0 - dummy sync flag']
  #allocation31 [shape = 's32[]', space=sflag, size = 0x4, offset = 0, fixed_abs, tag = 'sflag constant byte address 0x0 - dummy sync flag']
  #allocation32 [shape = 's32[]', space=sflag, size = 0x4, offset = 0, fixed_abs, tag = 'sflag constant byte address 0x0 - dummy sync flag']
  #allocation33 [shape = 's32[]', space=sflag, size = 0x4, offset = 0, fixed_abs, tag = 'sflag constant byte address 0x0 - dummy sync flag']
  #allocation34 [shape = 's32[]', space=sflag, size = 0x4, offset = 0, fixed_abs, tag = 'sflag constant byte address 0x0 - dummy sync flag']
  #allocation35 [shape = 's32[]', space=sflag, size = 0x4, offset = 0, fixed_abs, tag = 'sflag constant byte address 0x0 - dummy sync flag']
  #allocation36 [shape = 's32[]', space=sflag, size = 0x4, offset = 0, fixed_abs, tag = 'sflag constant byte address 0x0 - dummy sync flag']
  #allocation37 [shape = 's32[]', space=sflag, size = 0x4, offset = 0, fixed_abs, tag = 'sflag constant byte address 0x0 - dummy sync flag']
  #allocation38 [shape = 's32[]', space=sflag, size = 0x4, offset = 0, fixed_abs, tag = 'sflag constant byte address 0x0 - dummy sync flag']
  #allocation39 [shape = 's32[]', space=sflag, size = 0x4, offset = 0, fixed_abs, tag = 'sflag constant byte address 0x0 - dummy sync flag']
  #allocation40 [shape = 's32[]', space=sflag, size = 0x4, offset = 0, fixed_abs, tag = 'sflag constant byte address 0x0 - dummy sync flag']
  #allocation41 [shape = 's32[]', space=sflag, size = 0x4, offset = 0, fixed_abs, tag = 'sflag constant byte address 0x0 - dummy sync flag']
  #allocation42 [shape = 's32[]', space=sflag, size = 0x4, offset = 0, fixed_abs, tag = 'sflag constant byte address 0x0 - dummy sync flag']
  #allocation43 [shape = 's32[]', space=sflag, size = 0x4, offset = 0, fixed_abs, tag = 'sflag constant byte address 0x0 - dummy sync flag']
  #allocation44 [shape = 's32[]', space=sflag, size = 0x4, offset = 0, fixed_abs, tag = 'sflag constant byte address 0x0 - dummy sync flag']
  #allocation45 [shape = 's32[]', space=sflag, size = 0x4, offset = 0, fixed_abs, tag = 'sflag constant byte address 0x0 - dummy sync flag']
  #allocation46 [shape = 's32[]', space=sflag, size = 0x4, offset = 0, fixed_abs, tag = 'sflag constant byte address 0x0 - dummy sync flag']
  #allocation47 [shape = 's32[]', space=sflag, size = 0x4, offset = 0, fixed_abs, tag = 'sflag constant byte address 0x0 - dummy sync flag']
  #allocation48 [shape = 's32[]', space=sflag, size = 0x4, offset = 0, fixed_abs, tag = 'sflag constant byte address 0x0 - dummy sync flag']
  #allocation49 [shape = 's32[]', space=sflag, size = 0x4, offset = 0, fixed_abs, tag = 'sflag constant byte address 0x0 - dummy sync flag']
  #allocation50 [shape = 's32[]', space=sflag, size = 0x4, offset = 0, fixed_abs, tag = 'sflag constant byte address 0x0 - dummy sync flag']
  #allocation51 [shape = 's32[]', space=sflag, size = 0x4, offset = 0, fixed_abs, tag = 'sflag constant byte address 0x0 - dummy sync flag']
  #allocation52 [shape = 's32[]', space=sflag, size = 0x4, offset = 0, fixed_abs, tag = 'sflag constant byte address 0x0 - dummy sync flag']
  #allocation53 [shape = 's32[]', space=sflag, size = 0x4, offset = 0, fixed_abs, tag = 'sflag constant byte address 0x0 - dummy sync flag']
  #allocation54 [shape = 's32[]', space=sflag, size = 0x4, offset = 0, fixed_abs, tag = 'sflag constant byte address 0x0 - dummy sync flag']
  #allocation55 [shape = 's32[]', space=sflag, size = 0x4, offset = 0, fixed_abs, tag = 'sflag constant byte address 0x0 - dummy sync flag']
  #allocation56 [shape = 's32[]', space=sflag, size = 0x4, offset = 0, fixed_abs, tag = 'sflag constant byte address 0x0 - dummy sync flag']
  #allocation57 [shape = 's32[]', space=sflag, size = 0x4, offset = 0, fixed_abs, tag = 'sflag constant byte address 0x0 - dummy sync flag']
  #allocation58 [shape = 's32[]', space=sflag, size = 0x4, offset = 0, fixed_abs, tag = 'sflag constant byte address 0x0 - dummy sync flag']
  #allocation59 [shape = 's32[]', space=sflag, size = 0x4, offset = 0, fixed_abs, tag = 'sflag constant byte address 0x0 - dummy sync flag']
  #allocation60 [shape = 's32[]', space=sflag, size = 0x4, offset = 0, fixed_abs, tag = 'sflag constant byte address 0x0 - dummy sync flag']
  #allocation61 [shape = 's32[]', space=sflag, size = 0x4, offset = 0, fixed_abs, tag = 'sflag constant byte address 0x0 - dummy sync flag']
  %s0 = inlined_call_operand.hbm [shape: s32[8], index: 0, kind: input, shape index: {}]
  %s1 = inlined_call_operand.hbm [shape: s32[8], index: 1, kind: input, shape index: {}]
  %s2 = inlined_call_operand.vmem [shape: s32[8], index: 2, kind: input, shape index: {}]
  %s3 = inlined_call_operand.hbm [shape: f32[16,32], index: 3, kind: input, shape index: {}]
  %s4 = inlined_call_operand.hbm [shape: f32[32,32], index: 4, kind: input, shape index: {}]
  %s5 = inlined_call_operand.hbm [shape: f32[1,8,128], index: 5, kind: output, shape index: {}]
  %s6 = sld [smem:[#allocation0]]
  $region106: #{tpu_custom_call.1} parent=0
    _
  %s8 = ssub.s32 1, %s6
  %s9 = scalar_select 0, %s8, %s6
  %s11 = sshll.u32 %s0, 4
  %s12 = int_to_ptr.hbm [resolvable:$true] %s11
  %14 = dma.hbm_to_smem %s12, 16, [#allocation7], [#allocation6]
  %s16 = sshll.u32 %s1, 4
  %s17 = int_to_ptr.hbm [resolvable:$true] %s16
  %19 = dma.hbm_to_smem %s17, 16, [#allocation8], [#allocation6]
  %s21 = sshll.u32 %s2, 4
  %s22 = int_to_ptr.vmem [resolvable:$true] %s21
  %24 = dma.vmem_to_smem %s22, 16, [#allocation9], [#allocation6]
  %26 = dma.done [#allocation6], 48
  %27 = sfence
  $region1: #{tpu_custom_call.1} parent=0
    #allocation10 [shape = 'u8[4096]{0}', space=vmem, size = 0x1000, scoped, tag = 'output window, operand 0, single buffered']
    #allocation11 [shape = 's32[1]{0}', space=sflag, size = 0x4, scoped, tag = 'scoped memory for tpu_custom_call.1']
    %28 = vsyncpa [#allocation11], 0
    %s29 = smul.u32 0, 8
    %s30 = sld [smem:[#allocation7 + %s29]]
    %s31 = sld [smem:[#allocation8 + %s29]]
    %s32 = sld [smem:[#allocation9 + %s29]]
    %s33 = scalar_lea.hbm %s3, %s30
    // Predicated region
    $region2: #{tpu_custom_call.1} parent=1 // pred_check
      _
    $region3: #{tpu_custom_call.1} parent=1 // pred_check_branch
      %35 = sbr.rel target = $region5
    $region4: #{tpu_custom_call.1} parent=1 // pred_region
      %36 = sst [smem:[#allocation14]] [#allocation13]
      %37 = sst [smem:[#allocation15]] [#allocation12]
    $region5: #{tpu_custom_call.1} parent=1 // pred_fallthru
      _
    %39 = shalt.err (0)
    %s41 = sshll.u32 %s33, 4
    %s42 = int_to_ptr.hbm [resolvable:$true] %s41
    %s43 = sshll.u32 [#allocation2], 4
    %s44 = int_to_ptr.vmem [resolvable:$true] %s43
    %46 = dma.hbm_to_vmem [thread:$0]  %s42, 16, %s44, [#allocation5]
    %s47 = scalar_lea.hbm %s4, %s31
    %s48 = scalar_lea.sflag [#allocation5], 1
    // Predicated region
    $region6: #{tpu_custom_call.1} parent=1 // pred_check
      _
    $region7: #{tpu_custom_call.1} parent=1 // pred_check_branch
      %50 = sbr.rel target = $region9
    $region8: #{tpu_custom_call.1} parent=1 // pred_region
      %51 = sst [smem:[#allocation14]] [#allocation17]
      %52 = sst [smem:[#allocation15]] [#allocation16]
    $region9: #{tpu_custom_call.1} parent=1 // pred_fallthru
      _
    %54 = shalt.err (0)
    %s56 = sshll.u32 %s47, 4
    %s57 = int_to_ptr.hbm [resolvable:$true] %s56
    %s58 = sshll.u32 [#allocation3], 4
    %s59 = int_to_ptr.vmem [resolvable:$true] %s58
    %61 = dma.hbm_to_vmem [thread:$0]  %s57, 16, %s59, %s48
    %s62 = scalar_lea.hbm %s4, %s32
    %s63 = scalar_lea.sflag [#allocation5], 2
    // Predicated region
    $region10: #{tpu_custom_call.1} parent=1 // pred_check
      _
    $region11: #{tpu_custom_call.1} parent=1 // pred_check_branch
      %65 = sbr.rel target = $region13
    $region12: #{tpu_custom_call.1} parent=1 // pred_region
      %66 = sst [smem:[#allocation14]] [#allocation19]
      %67 = sst [smem:[#allocation15]] [#allocation18]
    $region13: #{tpu_custom_call.1} parent=1 // pred_fallthru
      _
    %69 = shalt.err (0)
    %s71 = sshll.u32 %s62, 4
    %s72 = int_to_ptr.hbm [resolvable:$true] %s71
    %s73 = sshll.u32 [#allocation4], 4
    %s74 = int_to_ptr.vmem [resolvable:$true] %s73
    %76 = dma.hbm_to_vmem [thread:$0]  %s72, 16, %s74, %s63
    %s77 = sadd.s32 %s29, 1
    %s78 = sld [smem:[#allocation7 + %s77]]
    %s79 = sld [smem:[#allocation8 + %s77]]
    %s80 = sld [smem:[#allocation9 + %s77]]
    %s81 = scalar_lea.hbm %s3, %s78
    %s82 = scalar_lea.vmem [#allocation2], 1
    // Predicated region
    $region14: #{tpu_custom_call.1} parent=1 // pred_check
      _
    $region15: #{tpu_custom_call.1} parent=1 // pred_check_branch
      %84 = sbr.rel target = $region17
    $region16: #{tpu_custom_call.1} parent=1 // pred_region
      %85 = sst [smem:[#allocation14]] [#allocation21]
      %86 = sst [smem:[#allocation15]] [#allocation20]
    $region17: #{tpu_custom_call.1} parent=1 // pred_fallthru
      _
    %88 = shalt.err (0)
    %s90 = sshll.u32 %s81, 4
    %s91 = int_to_ptr.hbm [resolvable:$true] %s90
    %s92 = sshll.u32 %s82, 4
    %s93 = int_to_ptr.vmem [resolvable:$true] %s92
    %95 = dma.hbm_to_vmem [thread:$0]  %s91, 16, %s93, [#allocation5]
    %s96 = scalar_lea.hbm %s4, %s79
    %s97 = scalar_lea.vmem [#allocation3], 1
    // Predicated region
    $region18: #{tpu_custom_call.1} parent=1 // pred_check
      _
    $region19: #{tpu_custom_call.1} parent=1 // pred_check_branch
      %99 = sbr.rel target = $region21
    $region20: #{tpu_custom_call.1} parent=1 // pred_region
      %100 = sst [smem:[#allocation14]] [#allocation23]
      %101 = sst [smem:[#allocation15]] [#allocation22]
    $region21: #{tpu_custom_call.1} parent=1 // pred_fallthru
      _
    %103 = shalt.err (0)
    %s105 = sshll.u32 %s96, 4
    %s106 = int_to_ptr.hbm [resolvable:$true] %s105
    %s107 = sshll.u32 %s97, 4
    %s108 = int_to_ptr.vmem [resolvable:$true] %s107
    %110 = dma.hbm_to_vmem [thread:$0]  %s106, 16, %s108, %s48
    %s111 = scalar_lea.hbm %s4, %s80
    %s112 = scalar_lea.vmem [#allocation4], 1
    // Predicated region
    $region22: #{tpu_custom_call.1} parent=1 // pred_check
      _
    $region23: #{tpu_custom_call.1} parent=1 // pred_check_branch
      %114 = sbr.rel target = $region25
    $region24: #{tpu_custom_call.1} parent=1 // pred_region
      %115 = sst [smem:[#allocation14]] [#allocation25]
      %116 = sst [smem:[#allocation15]] [#allocation24]
    $region25: #{tpu_custom_call.1} parent=1 // pred_fallthru
      _
    %118 = shalt.err (0)
    %s120 = sshll.u32 %s111, 4
    %s121 = int_to_ptr.hbm [resolvable:$true] %s120
    %s122 = sshll.u32 %s112, 4
    %s123 = int_to_ptr.vmem [resolvable:$true] %s122
    %125 = dma.hbm_to_vmem [thread:$0]  %s121, 16, %s123, %s63
    %s126 = sadd.s32 %s29, 2
    %s127 = sld [smem:[#allocation7 + %s126]]
    %s128 = sld [smem:[#allocation8 + %s126]]
    %s129 = sld [smem:[#allocation9 + %s126]]
    %s130 = scalar_lea.hbm %s3, %s127
    %s131 = scalar_lea.vmem [#allocation2], 2
    // Predicated region
    $region26: #{tpu_custom_call.1} parent=1 // pred_check
      _
    $region27: #{tpu_custom_call.1} parent=1 // pred_check_branch
      %133 = sbr.rel target = $region29
    $region28: #{tpu_custom_call.1} parent=1 // pred_region
      %134 = sst [smem:[#allocation14]] [#allocation27]
      %135 = sst [smem:[#allocation15]] [#allocation26]
    $region29: #{tpu_custom_call.1} parent=1 // pred_fallthru
      _
    %137 = shalt.err (0)
    %s139 = sshll.u32 %s130, 4
    %s140 = int_to_ptr.hbm [resolvable:$true] %s139
    %s141 = sshll.u32 %s131, 4
    %s142 = int_to_ptr.vmem [resolvable:$true] %s141
    %144 = dma.hbm_to_vmem [thread:$0]  %s140, 16, %s142, [#allocation5]
    %s145 = scalar_lea.hbm %s4, %s128
    %s146 = scalar_lea.vmem [#allocation3], 2
    // Predicated region
    $region30: #{tpu_custom_call.1} parent=1 // pred_check
      _
    $region31: #{tpu_custom_call.1} parent=1 // pred_check_branch
      %148 = sbr.rel target = $region33
    $region32: #{tpu_custom_call.1} parent=1 // pred_region
      %149 = sst [smem:[#allocation14]] [#allocation29]
      %150 = sst [smem:[#allocation15]] [#allocation28]
    $region33: #{tpu_custom_call.1} parent=1 // pred_fallthru
      _
    %152 = shalt.err (0)
    %s154 = sshll.u32 %s145, 4
    %s155 = int_to_ptr.hbm [resolvable:$true] %s154
    %s156 = sshll.u32 %s146, 4
    %s157 = int_to_ptr.vmem [resolvable:$true] %s156
    %159 = dma.hbm_to_vmem [thread:$0]  %s155, 16, %s157, %s48
    %s160 = scalar_lea.hbm %s4, %s129
    %s161 = scalar_lea.vmem [#allocation4], 2
    // Predicated region
    $region34: #{tpu_custom_call.1} parent=1 // pred_check
      _
    $region35: #{tpu_custom_call.1} parent=1 // pred_check_branch
      %163 = sbr.rel target = $region37
    $region36: #{tpu_custom_call.1} parent=1 // pred_region
      %164 = sst [smem:[#allocation14]] [#allocation31]
      %165 = sst [smem:[#allocation15]] [#allocation30]
    $region37: #{tpu_custom_call.1} parent=1 // pred_fallthru
      _
    %167 = shalt.err (0)
    %s169 = sshll.u32 %s160, 4
    %s170 = int_to_ptr.hbm [resolvable:$true] %s169
    %s171 = sshll.u32 %s161, 4
    %s172 = int_to_ptr.vmem [resolvable:$true] %s171
    %174 = dma.hbm_to_vmem [thread:$0]  %s170, 16, %s172, %s63
    %s175 = sadd.s32 %s29, 3
    %s176 = sld [smem:[#allocation7 + %s175]]
    %s177 = sld [smem:[#allocation8 + %s175]]
    %s178 = sld [smem:[#allocation9 + %s175]]
    %s179 = scalar_lea.hbm %s3, %s176
    %s180 = scalar_lea.vmem [#allocation2], 3
    // Predicated region
    $region38: #{tpu_custom_call.1} parent=1 // pred_check
      _
    $region39: #{tpu_custom_call.1} parent=1 // pred_check_branch
      %182 = sbr.rel target = $region41
    $region40: #{tpu_custom_call.1} parent=1 // pred_region
      %183 = sst [smem:[#allocation14]] [#allocation33]
      %184 = sst [smem:[#allocation15]] [#allocation32]
    $region41: #{tpu_custom_call.1} parent=1 // pred_fallthru
      _
    %186 = shalt.err (0)
    %s188 = sshll.u32 %s179, 4
    %s189 = int_to_ptr.hbm [resolvable:$true] %s188
    %s190 = sshll.u32 %s180, 4
    %s191 = int_to_ptr.vmem [resolvable:$true] %s190
    %193 = dma.hbm_to_vmem [thread:$0]  %s189, 16, %s191, [#allocation5]
    %s194 = scalar_lea.hbm %s4, %s177
    %s195 = scalar_lea.vmem [#allocation3], 3
    // Predicated region
    $region42: #{tpu_custom_call.1} parent=1 // pred_check
      _
    $region43: #{tpu_custom_call.1} parent=1 // pred_check_branch
      %197 = sbr.rel target = $region45
    $region44: #{tpu_custom_call.1} parent=1 // pred_region
      %198 = sst [smem:[#allocation14]] [#allocation35]
      %199 = sst [smem:[#allocation15]] [#allocation34]
    $region45: #{tpu_custom_call.1} parent=1 // pred_fallthru
      _
    %201 = shalt.err (0)
    %s203 = sshll.u32 %s194, 4
    %s204 = int_to_ptr.hbm [resolvable:$true] %s203
    %s205 = sshll.u32 %s195, 4
    %s206 = int_to_ptr.vmem [resolvable:$true] %s205
    %208 = dma.hbm_to_vmem [thread:$0]  %s204, 16, %s206, %s48
    %s209 = scalar_lea.hbm %s4, %s178
    %s210 = scalar_lea.vmem [#allocation4], 3
    // Predicated region
    $region46: #{tpu_custom_call.1} parent=1 // pred_check
      _
    $region47: #{tpu_custom_call.1} parent=1 // pred_check_branch
      %212 = sbr.rel target = $region49
    $region48: #{tpu_custom_call.1} parent=1 // pred_region
      %213 = sst [smem:[#allocation14]] [#allocation37]
      %214 = sst [smem:[#allocation15]] [#allocation36]
    $region49: #{tpu_custom_call.1} parent=1 // pred_fallthru
      _
    %216 = shalt.err (0)
    %s218 = sshll.u32 %s209, 4
    %s219 = int_to_ptr.hbm [resolvable:$true] %s218
    %s220 = sshll.u32 %s210, 4
    %s221 = int_to_ptr.vmem [resolvable:$true] %s220
    %223 = dma.hbm_to_vmem [thread:$0]  %s219, 16, %s221, %s63
    %s224 = sadd.s32 %s29, 4
    %s225 = sld [smem:[#allocation7 + %s224]]
    %s226 = sld [smem:[#allocation8 + %s224]]
    %s227 = sld [smem:[#allocation9 + %s224]]
    %s228 = scalar_lea.hbm %s3, %s225
    %s229 = scalar_lea.vmem [#allocation2], 4
    // Predicated region
    $region50: #{tpu_custom_call.1} parent=1 // pred_check
      _
    $region51: #{tpu_custom_call.1} parent=1 // pred_check_branch
      %231 = sbr.rel target = $region53
    $region52: #{tpu_custom_call.1} parent=1 // pred_region
      %232 = sst [smem:[#allocation14]] [#allocation39]
      %233 = sst [smem:[#allocation15]] [#allocation38]
    $region53: #{tpu_custom_call.1} parent=1 // pred_fallthru
      _
    %235 = shalt.err (0)
    %s237 = sshll.u32 %s228, 4
    %s238 = int_to_ptr.hbm [resolvable:$true] %s237
    %s239 = sshll.u32 %s229, 4
    %s240 = int_to_ptr.vmem [resolvable:$true] %s239
    %242 = dma.hbm_to_vmem [thread:$0]  %s238, 16, %s240, [#allocation5]
    %s243 = scalar_lea.hbm %s4, %s226
    %s244 = scalar_lea.vmem [#allocation3], 4
    // Predicated region
    $region54: #{tpu_custom_call.1} parent=1 // pred_check
      _
    $region55: #{tpu_custom_call.1} parent=1 // pred_check_branch
      %246 = sbr.rel target = $region57
    $region56: #{tpu_custom_call.1} parent=1 // pred_region
      %247 = sst [smem:[#allocation14]] [#allocation41]
      %248 = sst [smem:[#allocation15]] [#allocation40]
    $region57: #{tpu_custom_call.1} parent=1 // pred_fallthru
      _
    %250 = shalt.err (0)
    %s252 = sshll.u32 %s243, 4
    %s253 = int_to_ptr.hbm [resolvable:$true] %s252
    %s254 = sshll.u32 %s244, 4
    %s255 = int_to_ptr.vmem [resolvable:$true] %s254
    %257 = dma.hbm_to_vmem [thread:$0]  %s253, 16, %s255, %s48
    %s258 = scalar_lea.hbm %s4, %s227
    %s259 = scalar_lea.vmem [#allocation4], 4
    // Predicated region
    $region58: #{tpu_custom_call.1} parent=1 // pred_check
      _
    $region59: #{tpu_custom_call.1} parent=1 // pred_check_branch
      %261 = sbr.rel target = $region61
    $region60: #{tpu_custom_call.1} parent=1 // pred_region
      %262 = sst [smem:[#allocation14]] [#allocation43]
      %263 = sst [smem:[#allocation15]] [#allocation42]
    $region61: #{tpu_custom_call.1} parent=1 // pred_fallthru
      _
    %265 = shalt.err (0)
    %s267 = sshll.u32 %s258, 4
    %s268 = int_to_ptr.hbm [resolvable:$true] %s267
    %s269 = sshll.u32 %s259, 4
    %s270 = int_to_ptr.vmem [resolvable:$true] %s269
    %272 = dma.hbm_to_vmem [thread:$0]  %s268, 16, %s270, %s63
    %s273 = sadd.s32 %s29, 5
    %s274 = sld [smem:[#allocation7 + %s273]]
    %s275 = sld [smem:[#allocation8 + %s273]]
    %s276 = sld [smem:[#allocation9 + %s273]]
    %s277 = scalar_lea.hbm %s3, %s274
    %s278 = scalar_lea.vmem [#allocation2], 5
    // Predicated region
    $region62: #{tpu_custom_call.1} parent=1 // pred_check
      _
    $region63: #{tpu_custom_call.1} parent=1 // pred_check_branch
      %280 = sbr.rel target = $region65
    $region64: #{tpu_custom_call.1} parent=1 // pred_region
      %281 = sst [smem:[#allocation14]] [#allocation45]
      %282 = sst [smem:[#allocation15]] [#allocation44]
    $region65: #{tpu_custom_call.1} parent=1 // pred_fallthru
      _
    %284 = shalt.err (0)
    %s286 = sshll.u32 %s277, 4
    %s287 = int_to_ptr.hbm [resolvable:$true] %s286
    %s288 = sshll.u32 %s278, 4
    %s289 = int_to_ptr.vmem [resolvable:$true] %s288
    %291 = dma.hbm_to_vmem [thread:$0]  %s287, 16, %s289, [#allocation5]
    %s292 = scalar_lea.hbm %s4, %s275
    %s293 = scalar_lea.vmem [#allocation3], 5
    // Predicated region
    $region66: #{tpu_custom_call.1} parent=1 // pred_check
      _
    $region67: #{tpu_custom_call.1} parent=1 // pred_check_branch
      %295 = sbr.rel target = $region69
    $region68: #{tpu_custom_call.1} parent=1 // pred_region
      %296 = sst [smem:[#allocation14]] [#allocation47]
      %297 = sst [smem:[#allocation15]] [#allocation46]
    $region69: #{tpu_custom_call.1} parent=1 // pred_fallthru
      _
    %299 = shalt.err (0)
    %s301 = sshll.u32 %s292, 4
    %s302 = int_to_ptr.hbm [resolvable:$true] %s301
    %s303 = sshll.u32 %s293, 4
    %s304 = int_to_ptr.vmem [resolvable:$true] %s303
    %306 = dma.hbm_to_vmem [thread:$0]  %s302, 16, %s304, %s48
    %s307 = scalar_lea.hbm %s4, %s276
    %s308 = scalar_lea.vmem [#allocation4], 5
    // Predicated region
    $region70: #{tpu_custom_call.1} parent=1 // pred_check
      _
    $region71: #{tpu_custom_call.1} parent=1 // pred_check_branch
      %310 = sbr.rel target = $region73
    $region72: #{tpu_custom_call.1} parent=1 // pred_region
      %311 = sst [smem:[#allocation14]] [#allocation49]
      %312 = sst [smem:[#allocation15]] [#allocation48]
    $region73: #{tpu_custom_call.1} parent=1 // pred_fallthru
      _
    %314 = shalt.err (0)
    %s316 = sshll.u32 %s307, 4
    %s317 = int_to_ptr.hbm [resolvable:$true] %s316
    %s318 = sshll.u32 %s308, 4
    %s319 = int_to_ptr.vmem [resolvable:$true] %s318
    %321 = dma.hbm_to_vmem [thread:$0]  %s317, 16, %s319, %s63
    %s322 = sadd.s32 %s29, 6
    %s323 = sld [smem:[#allocation7 + %s322]]
    %s324 = sld [smem:[#allocation8 + %s322]]
    %s325 = sld [smem:[#allocation9 + %s322]]
    %s326 = scalar_lea.hbm %s3, %s323
    %s327 = scalar_lea.vmem [#allocation2], 6
    // Predicated region
    $region74: #{tpu_custom_call.1} parent=1 // pred_check
      _
    $region75: #{tpu_custom_call.1} parent=1 // pred_check_branch
      %329 = sbr.rel target = $region77
    $region76: #{tpu_custom_call.1} parent=1 // pred_region
      %330 = sst [smem:[#allocation14]] [#allocation51]
      %331 = sst [smem:[#allocation15]] [#allocation50]
    $region77: #{tpu_custom_call.1} parent=1 // pred_fallthru
      _
    %333 = shalt.err (0)
    %s335 = sshll.u32 %s326, 4
    %s336 = int_to_ptr.hbm [resolvable:$true] %s335
    %s337 = sshll.u32 %s327, 4
    %s338 = int_to_ptr.vmem [resolvable:$true] %s337
    %340 = dma.hbm_to_vmem [thread:$0]  %s336, 16, %s338, [#allocation5]
    %s341 = scalar_lea.hbm %s4, %s324
    %s342 = scalar_lea.vmem [#allocation3], 6
    // Predicated region
    $region78: #{tpu_custom_call.1} parent=1 // pred_check
      _
    $region79: #{tpu_custom_call.1} parent=1 // pred_check_branch
      %344 = sbr.rel target = $region81
    $region80: #{tpu_custom_call.1} parent=1 // pred_region
      %345 = sst [smem:[#allocation14]] [#allocation53]
      %346 = sst [smem:[#allocation15]] [#allocation52]
    $region81: #{tpu_custom_call.1} parent=1 // pred_fallthru
      _
    %348 = shalt.err (0)
    %s350 = sshll.u32 %s341, 4
    %s351 = int_to_ptr.hbm [resolvable:$true] %s350
    %s352 = sshll.u32 %s342, 4
    %s353 = int_to_ptr.vmem [resolvable:$true] %s352
    %355 = dma.hbm_to_vmem [thread:$0]  %s351, 16, %s353, %s48
    %s356 = scalar_lea.hbm %s4, %s325
    %s357 = scalar_lea.vmem [#allocation4], 6
    // Predicated region
    $region82: #{tpu_custom_call.1} parent=1 // pred_check
      _
    $region83: #{tpu_custom_call.1} parent=1 // pred_check_branch
      %359 = sbr.rel target = $region85
    $region84: #{tpu_custom_call.1} parent=1 // pred_region
      %360 = sst [smem:[#allocation14]] [#allocation55]
      %361 = sst [smem:[#allocation15]] [#allocation54]
    $region85: #{tpu_custom_call.1} parent=1 // pred_fallthru
      _
    %363 = shalt.err (0)
    %s365 = sshll.u32 %s356, 4
    %s366 = int_to_ptr.hbm [resolvable:$true] %s365
    %s367 = sshll.u32 %s357, 4
    %s368 = int_to_ptr.vmem [resolvable:$true] %s367
    %370 = dma.hbm_to_vmem [thread:$0]  %s366, 16, %s368, %s63
    %s371 = sadd.s32 %s29, 7
    %s372 = sld [smem:[#allocation7 + %s371]]
    %s373 = sld [smem:[#allocation8 + %s371]]
    %s374 = sld [smem:[#allocation9 + %s371]]
    %s375 = scalar_lea.hbm %s3, %s372
    %s376 = scalar_lea.vmem [#allocation2], 7
    // Predicated region
    $region86: #{tpu_custom_call.1} parent=1 // pred_check
      _
    $region87: #{tpu_custom_call.1} parent=1 // pred_check_branch
      %378 = sbr.rel target = $region89
    $region88: #{tpu_custom_call.1} parent=1 // pred_region
      %379 = sst [smem:[#allocation14]] [#allocation57]
      %380 = sst [smem:[#allocation15]] [#allocation56]
    $region89: #{tpu_custom_call.1} parent=1 // pred_fallthru
      _
    %382 = shalt.err (0)
    %s384 = sshll.u32 %s375, 4
    %s385 = int_to_ptr.hbm [resolvable:$true] %s384
    %s386 = sshll.u32 %s376, 4
    %s387 = int_to_ptr.vmem [resolvable:$true] %s386
    %389 = dma.hbm_to_vmem [thread:$0]  %s385, 16, %s387, [#allocation5]
    %s390 = scalar_lea.hbm %s4, %s373
    %s391 = scalar_lea.vmem [#allocation3], 7
    // Predicated region
    $region90: #{tpu_custom_call.1} parent=1 // pred_check
      _
    $region91: #{tpu_custom_call.1} parent=1 // pred_check_branch
      %393 = sbr.rel target = $region93
    $region92: #{tpu_custom_call.1} parent=1 // pred_region
      %394 = sst [smem:[#allocation14]] [#allocation59]
      %395 = sst [smem:[#allocation15]] [#allocation58]
    $region93: #{tpu_custom_call.1} parent=1 // pred_fallthru
      _
    %397 = shalt.err (0)
    %s399 = sshll.u32 %s390, 4
    %s400 = int_to_ptr.hbm [resolvable:$true] %s399
    %s401 = sshll.u32 %s391, 4
    %s402 = int_to_ptr.vmem [resolvable:$true] %s401
    %404 = dma.hbm_to_vmem [thread:$0]  %s400, 16, %s402, %s48
    %s405 = scalar_lea.hbm %s4, %s374
    %s406 = scalar_lea.vmem [#allocation4], 7
    // Predicated region
    $region94: #{tpu_custom_call.1} parent=1 // pred_check
      _
    $region95: #{tpu_custom_call.1} parent=1 // pred_check_branch
      %408 = sbr.rel target = $region97
    $region96: #{tpu_custom_call.1} parent=1 // pred_region
      %409 = sst [smem:[#allocation14]] [#allocation61]
      %410 = sst [smem:[#allocation15]] [#allocation60]
    $region97: #{tpu_custom_call.1} parent=1 // pred_fallthru
      _
    %412 = shalt.err (0)
    %s414 = sshll.u32 %s405, 4
    %s415 = int_to_ptr.hbm [resolvable:$true] %s414
    %s416 = sshll.u32 %s406, 4
    %s417 = int_to_ptr.vmem [resolvable:$true] %s416
    %419 = dma.hbm_to_vmem [thread:$0]  %s415, 16, %s417, %s63
    %s420 = smul.u32 1, 1
    %s421 = sshll.u32 %s420, 4
    %422 = dma.done [#allocation5], %s421
    %s423 = sshll.u32 %s420, 4
    %424 = dma.done %s48, %s423
    %s425 = sshll.u32 %s420, 4
    %426 = dma.done %s63, %s425
    %s427 = sshll.u32 %s420, 4
    %428 = dma.done [#allocation5], %s427
    %s429 = sshll.u32 %s420, 4
    %430 = dma.done %s48, %s429
    %s431 = sshll.u32 %s420, 4
    %432 = dma.done %s63, %s431
    %s433 = sshll.u32 %s420, 4
    %434 = dma.done [#allocation5], %s433
    %s435 = sshll.u32 %s420, 4
    %436 = dma.done %s48, %s435
    %s437 = sshll.u32 %s420, 4
    %438 = dma.done %s63, %s437
    %s439 = sshll.u32 %s420, 4
    %440 = dma.done [#allocation5], %s439
    %s441 = sshll.u32 %s420, 4
    %442 = dma.done %s48, %s441
    %s443 = sshll.u32 %s420, 4
    %444 = dma.done %s63, %s443
    %s445 = sshll.u32 %s420, 4
    %446 = dma.done [#allocation5], %s445
    %s447 = sshll.u32 %s420, 4
    %448 = dma.done %s48, %s447
    %s449 = sshll.u32 %s420, 4
    %450 = dma.done %s63, %s449
    %s451 = sshll.u32 %s420, 4
    %452 = dma.done [#allocation5], %s451
    %s453 = sshll.u32 %s420, 4
    %454 = dma.done %s48, %s453
    %s455 = sshll.u32 %s420, 4
    %456 = dma.done %s63, %s455
    %s457 = sshll.u32 %s420, 4
    %458 = dma.done [#allocation5], %s457
    %s459 = sshll.u32 %s420, 4
    %460 = dma.done %s48, %s459
    %s461 = sshll.u32 %s420, 4
    %462 = dma.done %s63, %s461
    %s463 = sshll.u32 %s420, 4
    %464 = dma.done [#allocation5], %s463
    %s465 = sshll.u32 %s420, 4
    %466 = dma.done %s48, %s465
    %s467 = sshll.u32 %s420, 4
    %468 = dma.done %s63, %s467
    %v469 = vld [vmem:[#allocation2] sm:$0xff]
    %v470 = vld [vmem:[#allocation3] sm:$0xff]
    %v471 = vld [vmem:[#allocation4] sm:$0xff]
    %v472 = vsub.f32 %v470, %v471
    %v473 = vmul.f32 %v469, %v472
    %vm474 = vcmask 261120
    %v476 = vsel %vm474, %v473, 0
    %478 = vmatpush.msra.mxu0 0.0
    %479 = vmatpush.msra.mxu0 0.0
    %480 = vmatpush.msra.mxu0 0.0
    %481 = vmatpush.msra.mxu0 0.0
    %482 = vmatpush.msra.mxu0 0.0
    %483 = vmatpush.msra.mxu0 0.0
    %484 = vmatpush.msra.mxu0 0.0
    %485 = vmatpush.msra.mxu0 0.0
    %486 = vmatpush.msra.mxu0 0.0
    %487 = vmatpush.msra.mxu0 0.0
    %488 = vmatpush.msra.mxu0 0.0
    %489 = vmatpush.msra.mxu0 0.0
    %490 = vmatpush.msra.mxu0 1.0
    %491 = vmatpush.msra.mxu0 1.0
    %492 = vmatpush.msra.mxu0 1.0
    %493 = vmatpush.msra.mxu0 1.0
    %494 = vmatmul.f32.gmra.mxu0 %v476
    %v495 = vpop.f32.mrf.mxu0
    %v496 = vadd.f32 0.0, %v495
    %497 = vdwg.mxu0
    %v498 = vmin.f32 %v496, 0.0
    %v499 = vand.u32 2147483647, %v496
    %v500 = vsub.f32 0.0, %v499
    %v501 = vmul.f32 %v500, 1.442695
    %v502 = vpow.pop %v501
    %v503 = vadd.f32 %v502, 1.0
    %v504 = vlog2.pop %v503
    %v505 = vmul.f32 %v504, 0.6931472
    %v506 = vsub.f32 %v498, %v505
    %v507 = vlaneseq
    %v508 = vshrl.u32 %v507, 7
    %v509 = vstv %s29
    %v510 = vadd.s32 %v509, %v508
    %vm511 = vcmp.lt.s32.totalorder %v510, 8
    %v512 = vsel %vm511, %v506, 0.0
    %vm513 = vcmask 7168
    %v514 = vsel %vm513, %v512, 0.0
    %515 = vadd.xlane.f32.xlu0 %v514
    %v516 = vpop.xlane.xlu0 %515
    %v517 = vrot.slane %v516, 4
    %v518 = vadd.f32 %v516, %v517
    %v519 = vrot.slane %v518, 2
    %v520 = vadd.f32 %v518, %v519
    %v521 = vrot.slane %v520, 1
    %v522 = vadd.f32 %v520, %v521
    %s523 = vtos %v522
    %v524 = vstv %s523
    %525 = vst [vmem:[#allocation10] sm:$0xff] %v524
    // Predicated region
    $region98: #{tpu_custom_call.1} parent=1 // pred_check
      _
    $region99: #{tpu_custom_call.1} parent=1 // pred_check_branch
      %527 = sbr.rel (0) target = $region101
    $region100: #{tpu_custom_call.1} parent=1 // pred_region
      %529 = vsyncadd [#allocation11], 0
      %s531 = sshll.u32 [#allocation10], 4
      %s532 = int_to_ptr.vmem [resolvable:$true] %s531
      %s533 = sshll.u32 %s5, 4
      %s534 = int_to_ptr.hbm [resolvable:$true] %s533
      %536 = dma.vmem_to_hbm [thread:$0]  %s532, 128, %s534, [#allocation11]
    $region101: #{tpu_custom_call.1} parent=1 // pred_fallthru
      _
    // Predicated region
    $region102: #{tpu_custom_call.1} parent=1 // pred_check
      _
    $region103: #{tpu_custom_call.1} parent=1 // pred_check_branch
      %538 = sbr.rel (0) target = $region105
    $region104: #{tpu_custom_call.1} parent=1 // pred_region
      %540 = dma.done [#allocation11], 128
    $region105: #{tpu_custom_call.1} parent=1 // pred_fallthru
      _
    %541 = vsyncpa [#allocation11], 1
  %542 = vsyncmov [#allocation5]
  %s543 = vpop.sfrf %542
  %p544 = scmp.eq.s32.totalorder %s543, 0
  %p545 = pneg %p544
  %547 = shalt.err (%p545)
  %s548 = scalar_lea.sflag [#allocation5], 1
  %549 = vsyncmov %s548
  %s550 = vpop.sfrf %549
  %p551 = scmp.eq.s32.totalorder %s550, 0
  %p552 = pneg %p551
  %554 = shalt.err (%p552)
  %s555 = scalar_lea.sflag [#allocation5], 2
  %556 = vsyncmov %s555
  %s557 = vpop.sfrf %556
  %p558 = scmp.eq.s32.totalorder %s557, 0
  %p559 = pneg %p558
  %561 = shalt.err (%p559)

</llo_original>
